<compile_context>
chip_gen: v7x
topology: tpu7x:2x2x1
jax: 0.10.0
libtpu: 0.0.40
codegen_flags: <defaults>
</compile_context>

<pallas_src>
import functools
import math

import jax
import jax.numpy as jnp
from jax.experimental import pallas as pl
from jax.experimental.pallas import tpu as pltpu

_LOG_2PI = math.log(2.0 * math.pi)


def _round_up(x, m):
    return m * ((x + m - 1) // m)


# ----------------------------------------------------------------------------
# Kernel
# ----------------------------------------------------------------------------
def _fused_policy_kernel(n_linear, f_pad, q_dim, reverse_kl, max_div,
                         obs_ref, eps_ref, w_ref, b_ref, out_ref):
    """One batch tile: fused policy+prior MLP, rsample, log_prob, clamped KL.

    obs_ref : [TB, F_pad]  bf16 observations (zero-padded columns)
    eps_ref : [TB, q]      f32 reparameterization noise (elementwise only)
    w_ref   : [n_linear, D, D]  bf16 block-diagonal fused weights (resident)
    b_ref   : [n_linear, 1, D]  f32 fused biases (resident)
    out_ref : [TB, 128]    cols [0:q)=action, [q:2q)=log_prob, [2q]=divergence
    """
    # Layer 0: contract only over the obs rows of the fused weight (K = F_pad,
    # not D).  Zero-padded bias lanes stay zero through ReLU and the zero
    # off-block weight rows keep policy / prior exactly separated.
    h = jnp.dot(obs_ref[...], w_ref[0, :f_pad, :],
                preferred_element_type=jnp.float32) + b_ref[0]
    for i in range(1, n_linear):
        h = jnp.maximum(h, 0.0)                      # ReLU on all but the last
        h = jnp.dot(h.astype(jnp.bfloat16), w_ref[i],
                    preferred_element_type=jnp.float32) + b_ref[i]
    y = h

    # Output layout of the fused last layer: [mu_p | log_sig_p | mu_q | log_sig_q]
    mu_p = y[:, 0 * q_dim:1 * q_dim]
    logsig_p = y[:, 1 * q_dim:2 * q_dim]
    mu_q = y[:, 2 * q_dim:3 * q_dim]
    logsig_q = y[:, 3 * q_dim:4 * q_dim]

    eps = eps_ref[...]

    # rsample (reparameterization trick).
    sig_p = jnp.exp(logsig_p)
    action = mu_p + sig_p * eps

    # log_prob of the sample: (action - mu_p)/sig_p == eps by construction.
    log_prob = -0.5 * (eps * eps + 2.0 * logsig_p + _LOG_2PI)

    # Analytic diagonal-Gaussian KL, summed over action dim, clamped.
    dmu = mu_p - mu_q
    if reverse_kl:
        # KL(prior || policy)
        sig_q = jnp.exp(logsig_q)
        kl = (logsig_p - logsig_q
              + 0.5 * (sig_q * sig_q + dmu * dmu) * jnp.exp(-2.0 * logsig_p)
              - 0.5)
    else:
        # KL(policy || prior)
        kl = (logsig_q - logsig_p
              + 0.5 * (sig_p * sig_p + dmu * dmu) * jnp.exp(-2.0 * logsig_q)
              - 0.5)
    div = jnp.clip(jnp.sum(kl, axis=-1, keepdims=True), -max_div, max_div)

    # Direct sliced stores into the lane-dense output tile (no concatenate).
    tb, d_out = out_ref.shape
    out_ref[:, 0:q_dim] = action
    out_ref[:, q_dim:2 * q_dim] = log_prob
    out_ref[:, 2 * q_dim:2 * q_dim + 1] = div
    out_ref[:, 2 * q_dim + 1:] = jnp.zeros((tb, d_out - 2 * q_dim - 1),
                                           jnp.float32)


# ----------------------------------------------------------------------------
# One-time weight packing (host side; result is cached / reused every call)
# ----------------------------------------------------------------------------
def pack_fused_params(policy_params, prior_params, obs_dim, hidden_dim, q_dim):
    """Fuse policy + prior MLPs into block-diagonal, lane-padded bf16 stacks.

    Layer 0 : shared obs input, outputs concatenated   -> rows [:obs_dim]
    Layers 1..n-2 : block-diagonal [hid|hid]
    Last layer : block, outputs [mu_p|ls_p|mu_q|ls_q]
    Everything is zero-padded into [D, D] tiles (D multiple of 128) and stacked.
    Returns (w_stack bf16 [n,D,D], b_stack f32 [n,1,D]).
    """
    pol_w, pol_b = policy_params
    pri_w, pri_b = prior_params
    n_linear = len(pol_w)
    assert n_linear >= 2, "MultiLayerLinear is expected to have >= 2 linears"
    hid = hidden_dim
    f_pad = _round_up(obs_dim, 16)
    D = _round_up(max(2 * hid, 4 * q_dim, f_pad, 128), 128)

    ws, bs = [], []
    for i in range(n_linear):
        W = jnp.zeros((D, D), jnp.float32)
        Bv = jnp.zeros((1, D), jnp.float32)
        pw = jnp.asarray(pol_w[i], jnp.float32)
        qw = jnp.asarray(pri_w[i], jnp.float32)
        pb = jnp.asarray(pol_b[i], jnp.float32).reshape(1, -1)
        qb = jnp.asarray(pri_b[i], jnp.float32).reshape(1, -1)
        if i == 0:
            W = W.at[:obs_dim, :hid].set(pw)
            W = W.at[:obs_dim, hid:2 * hid].set(qw)
            Bv = Bv.at[:, :hid].set(pb)
            Bv = Bv.at[:, hid:2 * hid].set(qb)
        elif i < n_linear - 1:
            W = W.at[:hid, :hid].set(pw)
            W = W.at[hid:2 * hid, hid:2 * hid].set(qw)
            Bv = Bv.at[:, :hid].set(pb)
            Bv = Bv.at[:, hid:2 * hid].set(qb)
        else:
            W = W.at[:hid, :2 * q_dim].set(pw)
            W = W.at[hid:2 * hid, 2 * q_dim:4 * q_dim].set(qw)
            Bv = Bv.at[:, :2 * q_dim].set(pb)
            Bv = Bv.at[:, 2 * q_dim:4 * q_dim].set(qb)
        ws.append(W)
        bs.append(Bv)

    w_stack = jnp.stack(ws, axis=0).astype(jnp.bfloat16)
    b_stack = jnp.stack(bs, axis=0)  # keep biases in f32 (added post-MXU)
    return jax.device_put(w_stack), jax.device_put(b_stack)


# ----------------------------------------------------------------------------
# Jitted forward (hot path) -- packed weights passed in, never rebuilt
# ----------------------------------------------------------------------------
@functools.partial(
    jax.jit,
    static_argnames=("q_embed_dim", "reverse_kl", "max_divergence_range",
                     "batch_tile"))
def skill_prior_policy_forward(obs, eps, w_stack, b_stack, *, q_embed_dim,
                               reverse_kl=False, max_divergence_range=100.0,
                               batch_tile=1024):
    B, F = obs.shape
    q = q_embed_dim
    n_linear, D, _ = w_stack.shape
    f_pad = _round_up(F, 16)
    assert f_pad <= D and 4 * q <= D
    d_out = _round_up(2 * q + 1, 128)     # lane-dense output slab

    # Batch tiling: multiples of 16 (bf16 sublane pack), padded so the last
    # tile is never ragged; keep >= 2 grid steps when possible (v7x megacore).
    assert batch_tile % 16 == 0
    b16 = _round_up(B, 16)
    tb = min(batch_tile, b16)
    if tb >= b16 and b16 >= 32:
        tb = _round_up((b16 + 1) // 2, 16)
    n_steps = pl.cdiv(b16, tb)
    b_pad = tb * n_steps

    obs_p = jnp.pad(obs.astype(jnp.bfloat16), ((0, b_pad - B), (0, f_pad - F)))
    eps_p = jnp.pad(eps.astype(jnp.float32), ((0, b_pad - B), (0, 0)))

    kernel = functools.partial(_fused_policy_kernel, n_linear, f_pad, q,
                               bool(reverse_kl), float(max_divergence_range))

    out = pl.pallas_call(
        kernel,
        out_shape=jax.ShapeDtypeStruct((b_pad, d_out), jnp.float32),
        grid_spec=pltpu.PrefetchScalarGridSpec(
            num_scalar_prefetch=0,
            grid=(n_steps,),
            in_specs=[
                # batch-tiled activations (unpadded lane widths: full-dim rule)
                pl.BlockSpec((tb, f_pad), lambda i: (i, 0)),
                pl.BlockSpec((tb, q), lambda i: (i, 0)),
                # weights / biases: constant index_map -> VMEM-resident
                pl.BlockSpec((n_linear, D, D), lambda i: (0, 0, 0)),
                pl.BlockSpec((n_linear, 1, D), lambda i: (0, 0, 0)),
            ],
            out_specs=pl.BlockSpec((tb, d_out), lambda i: (i, 0)),
        ),
        compiler_params=pltpu.CompilerParams(
            dimension_semantics=("parallel",),
            vmem_limit_bytes=32 * 1024 * 1024),
    )(obs_p, eps_p, w_stack, b_stack)

    action = out[:B, :q]
    log_prob = out[:B, q:2 * q]
    divergence = out[:B, 2 * q]
    return dict(action=action, log_prob=log_prob, prior_divergence=divergence)


# ----------------------------------------------------------------------------
# Deterministic parameter init + pure-JAX reference
# ----------------------------------------------------------------------------
def _init_mlp_params(key, in_dim, hidden_dim, out_dim, layers_num):
    """MultiLayerLinear: layers_num+1 linears, weights stored [in, out]."""
    dims = [in_dim] + [hidden_dim] * layers_num + [out_dim]
    ws, bs = [], []
    for i in range(len(dims) - 1):
        key, kw, kb = jax.random.split(key, 3)
        scale = 1.0 / math.sqrt(dims[i])
        ws.append(jax.random.uniform(kw, (dims[i], dims[i + 1]),
                                     jnp.float32, -scale, scale))
        bs.append(jax.random.uniform(kb, (1, dims[i + 1]),
                                     jnp.float32, -scale, scale))
    return ws, bs


def _reference_forward(obs, eps, policy_params, prior_params, *,
                       q_embed_dim, reverse_kl, max_divergence_range):
    def mlp(x, ws, bs):
        h = x
        for w, b in zip(ws[:-1], bs[:-1]):
            h = jnp.maximum(h @ w + b, 0.0)
        return h @ ws[-1] + bs[-1]

    pol = mlp(obs, *policy_params)
    pri = mlp(obs, *prior_params)
    mu_p, ls_p = pol[:, :q_embed_dim], pol[:, q_embed_dim:]
    mu_q, ls_q = pri[:, :q_embed_dim], pri[:, q_embed_dim:]
    s_p, s_q = jnp.exp(ls_p), jnp.exp(ls_q)
    action = mu_p + s_p * eps
    log_prob = -0.5 * (((action - mu_p) / s_p) ** 2 + 2.0 * ls_p + _LOG_2PI)
    if reverse_kl:
        kl = ls_p - ls_q + (s_q ** 2 + (mu_q - mu_p) ** 2) / (2 * s_p ** 2) - 0.5
    else:
        kl = ls_q - ls_p + (s_p ** 2 + (mu_p - mu_q) ** 2) / (2 * s_q ** 2) - 0.5
    div = jnp.clip(kl.sum(-1), -max_divergence_range, max_divergence_range)
    return dict(action=action, log_prob=log_prob, prior_divergence=div)


if __name__ == "__main__":
    # Small shapes consistent with the module's MLP structure.
    B = 256                  # batch (>= 2 tiles -> exercises the grid / v7x path)
    prior_input_dim = 32     # obs_dim
    prior_hidden_dim = 64    # -> fused hidden = 128 (lane dense)
    q_embed_dim = 16         # action_dim (each net outputs 2 * q_embed_dim)
    prior_net_layers = 2     # -> 3 linears per net
    reverse_KL = False
    max_divergence_range = 100.0

    key = jax.random.PRNGKey(0)
    k_obs, k_eps, k_pol, k_pri = jax.random.split(key, 4)

    obs = jax.random.normal(k_obs, (B, prior_input_dim), jnp.float32)
    eps = jax.random.normal(k_eps, (B, q_embed_dim), jnp.float32)

    policy_params = _init_mlp_params(k_pol, prior_input_dim, prior_hidden_dim,
                                     2 * q_embed_dim, prior_net_layers)
    prior_params = _init_mlp_params(k_pri, prior_input_dim, prior_hidden_dim,
                                    2 * q_embed_dim, prior_net_layers)

    # The served "checkpoint" is bf16: both kernel and reference use the same
    # bf16-rounded weights (the kernel keeps them packed in bf16 for the MXU).
    to_bf16_rounded = lambda p: jax.tree_util.tree_map(
        lambda a: a.astype(jnp.bfloat16).astype(jnp.float32), p)
    policy_params = to_bf16_rounded(policy_params)
    prior_params = to_bf16_rounded(prior_params)

    # One-time packing (persistent device arrays), outside the hot path.
    w_stack, b_stack = pack_fused_params(policy_params, prior_params,
                                         prior_input_dim, prior_hidden_dim,
                                         q_embed_dim)

    out = skill_prior_policy_forward(
        obs, eps, w_stack, b_stack, q_embed_dim=q_embed_dim,
        reverse_kl=reverse_KL, max_divergence_range=max_divergence_range,
        batch_tile=1024)
    jax.block_until_ready(out)

    ref = _reference_forward(
        obs, eps, policy_params, prior_params,
        q_embed_dim=q_embed_dim, reverse_kl=reverse_KL,
        max_divergence_range=max_divergence_range)
    jax.block_until_ready(ref)

    assert out["action"].shape == (B, q_embed_dim)
    assert out["log_prob"].shape == (B, q_embed_dim)
    assert out["prior_divergence"].shape == (B,)
    # Tolerances account for bf16 activation rounding on the MXU path
    # (weights are identical bf16 values in kernel and reference).
    assert jnp.allclose(out["action"], ref["action"],
                        atol=3e-2, rtol=3e-2), "action"
    assert jnp.allclose(out["log_prob"], ref["log_prob"],
                        atol=3e-2, rtol=3e-2), "log_prob"
    assert jnp.allclose(out["prior_divergence"], ref["prior_divergence"],
                        atol=3e-1, rtol=3e-2), "prior_divergence"

    print("KERNEL_OK")
</pallas_src>

<mosaic_0001>
module attributes {stable_mosaic.version = 11 : i64} {
  func.func @_fused_policy_kernel(%arg0: i32, %arg1: memref<128x32xbf16, #tpu.memory_space<vmem>>, %arg2: memref<128x16xf32, #tpu.memory_space<vmem>>, %arg3: memref<3x128x128xbf16, #tpu.memory_space<vmem>>, %arg4: memref<3x1x128xf32, #tpu.memory_space<vmem>>, %arg5: memref<128x128xf32, #tpu.memory_space<vmem>>) attributes {dimension_semantics = [#tpu.dimension_semantics<parallel>], iteration_bounds = array<i64: 2>, scalar_prefetch = 0 : i64, scratch_operands = 0 : i64, tpu.core_type = #tpu.core_type<tc>, window_params = [{transform_indices = @transform_0, window_bounds = array<i64: 128, 32>}, {transform_indices = @transform_1, window_bounds = array<i64: 128, 16>}, {pipeline_mode = #tpu.pipeline_mode<synchronous>, transform_indices = @transform_2, window_bounds = array<i64: 3, 128, 128>}, {pipeline_mode = #tpu.pipeline_mode<synchronous>, transform_indices = @transform_3, window_bounds = array<i64: 3, 1, 128>}, {transform_indices = @transform_4, window_bounds = array<i64: 128, 128>}]} {
    %c0 = arith.constant 0 : index
    %c0_0 = arith.constant 0 : index
    %0 = vector.load %arg1[%c0, %c0_0] : memref<128x32xbf16, #tpu.memory_space<vmem>>, vector<128x32xbf16>
    %c0_1 = arith.constant 0 : index
    %c0_2 = arith.constant 0 : index
    %c0_3 = arith.constant 0 : index
    %1 = vector.load %arg3[%c0_1, %c0_2, %c0_3] : memref<3x128x128xbf16, #tpu.memory_space<vmem>>, vector<1x32x128xbf16>
    %2 = vector.shape_cast %1 : vector<1x32x128xbf16> to vector<32x128xbf16>
    %cst = arith.constant dense<0.000000e+00> : vector<128x128xf32>
    %3 = tpu.matmul %0, %2, %cst {dimension_numbers = #tpu.dot_dimension_numbers<[1], [0], [0], [1], [0, 0, 1, 1], [], []>} : vector<128x32xbf16>, vector<32x128xbf16>, vector<128x128xf32> -> vector<128x128xf32>
    %c0_4 = arith.constant 0 : index
    %c0_5 = arith.constant 0 : index
    %c0_6 = arith.constant 0 : index
    %4 = vector.load %arg4[%c0_4, %c0_5, %c0_6] : memref<3x1x128xf32, #tpu.memory_space<vmem>>, vector<1x1x128xf32>
    %5 = vector.shape_cast %4 : vector<1x1x128xf32> to vector<1x128xf32>
    %6 = vector.broadcast %5 : vector<1x128xf32> to vector<128x128xf32>
    %7 = arith.addf %3, %6 : vector<128x128xf32>
    %cst_7 = arith.constant 0.000000e+00 : f32
    %8 = vector.broadcast %cst_7 : f32 to vector<128x128xf32>
    %9 = arith.maximumf %7, %8 : vector<128x128xf32>
    %10 = arith.truncf %9 : vector<128x128xf32> to vector<128x128xbf16>
    %c1 = arith.constant 1 : index
    %c0_8 = arith.constant 0 : index
    %c0_9 = arith.constant 0 : index
    %11 = vector.load %arg3[%c1, %c0_8, %c0_9] : memref<3x128x128xbf16, #tpu.memory_space<vmem>>, vector<1x128x128xbf16>
    %12 = vector.shape_cast %11 : vector<1x128x128xbf16> to vector<128x128xbf16>
    %cst_10 = arith.constant dense<0.000000e+00> : vector<128x128xf32>
    %13 = tpu.matmul %10, %12, %cst_10 {dimension_numbers = #tpu.dot_dimension_numbers<[1], [0], [0], [1], [0, 0, 1, 1], [], []>} : vector<128x128xbf16>, vector<128x128xbf16>, vector<128x128xf32> -> vector<128x128xf32>
    %c1_11 = arith.constant 1 : index
    %c0_12 = arith.constant 0 : index
    %c0_13 = arith.constant 0 : index
    %14 = vector.load %arg4[%c1_11, %c0_12, %c0_13] : memref<3x1x128xf32, #tpu.memory_space<vmem>>, vector<1x1x128xf32>
    %15 = vector.shape_cast %14 : vector<1x1x128xf32> to vector<1x128xf32>
    %16 = vector.broadcast %15 : vector<1x128xf32> to vector<128x128xf32>
    %17 = arith.addf %13, %16 : vector<128x128xf32>
    %cst_14 = arith.constant 0.000000e+00 : f32
    %18 = vector.broadcast %cst_14 : f32 to vector<128x128xf32>
    %19 = arith.maximumf %17, %18 : vector<128x128xf32>
    %20 = arith.truncf %19 : vector<128x128xf32> to vector<128x128xbf16>
    %c2 = arith.constant 2 : index
    %c0_15 = arith.constant 0 : index
    %c0_16 = arith.constant 0 : index
    %21 = vector.load %arg3[%c2, %c0_15, %c0_16] : memref<3x128x128xbf16, #tpu.memory_space<vmem>>, vector<1x128x128xbf16>
    %22 = vector.shape_cast %21 : vector<1x128x128xbf16> to vector<128x128xbf16>
    %cst_17 = arith.constant dense<0.000000e+00> : vector<128x128xf32>
    %23 = tpu.matmul %20, %22, %cst_17 {dimension_numbers = #tpu.dot_dimension_numbers<[1], [0], [0], [1], [0, 0, 1, 1], [], []>} : vector<128x128xbf16>, vector<128x128xbf16>, vector<128x128xf32> -> vector<128x128xf32>
    %c2_18 = arith.constant 2 : index
    %c0_19 = arith.constant 0 : index
    %c0_20 = arith.constant 0 : index
    %24 = vector.load %arg4[%c2_18, %c0_19, %c0_20] : memref<3x1x128xf32, #tpu.memory_space<vmem>>, vector<1x1x128xf32>
    %25 = vector.shape_cast %24 : vector<1x1x128xf32> to vector<1x128xf32>
    %26 = vector.broadcast %25 : vector<1x128xf32> to vector<128x128xf32>
    %27 = arith.addf %23, %26 : vector<128x128xf32>
    %28 = vector.extract_strided_slice %27 {offsets = [0, 0], sizes = [128, 16], strides = [1, 1]} : vector<128x128xf32> to vector<128x16xf32>
    %29 = vector.extract_strided_slice %27 {offsets = [0, 16], sizes = [128, 16], strides = [1, 1]} : vector<128x128xf32> to vector<128x16xf32>
    %30 = vector.extract_strided_slice %27 {offsets = [0, 32], sizes = [128, 16], strides = [1, 1]} : vector<128x128xf32> to vector<128x16xf32>
    %31 = vector.extract_strided_slice %27 {offsets = [0, 48], sizes = [128, 16], strides = [1, 1]} : vector<128x128xf32> to vector<128x16xf32>
    %c0_21 = arith.constant 0 : index
    %c0_22 = arith.constant 0 : index
    %32 = vector.load %arg2[%c0_21, %c0_22] : memref<128x16xf32, #tpu.memory_space<vmem>>, vector<128x16xf32>
    %33 = math.exp %29 : vector<128x16xf32>
    %34 = arith.mulf %33, %32 : vector<128x16xf32>
    %35 = arith.addf %28, %34 : vector<128x16xf32>
    %36 = arith.mulf %32, %32 : vector<128x16xf32>
    %cst_23 = arith.constant 2.000000e+00 : f32
    %37 = vector.broadcast %cst_23 : f32 to vector<128x16xf32>
    %38 = arith.mulf %37, %29 : vector<128x16xf32>
    %39 = arith.addf %36, %38 : vector<128x16xf32>
    %cst_24 = arith.constant 1.83787704 : f32
    %40 = vector.broadcast %cst_24 : f32 to vector<128x16xf32>
    %41 = arith.addf %39, %40 : vector<128x16xf32>
    %cst_25 = arith.constant -5.000000e-01 : f32
    %42 = vector.broadcast %cst_25 : f32 to vector<128x16xf32>
    %43 = arith.mulf %42, %41 : vector<128x16xf32>
    %44 = arith.subf %28, %30 : vector<128x16xf32>
    %45 = arith.subf %31, %29 : vector<128x16xf32>
    %46 = arith.mulf %33, %33 : vector<128x16xf32>
    %47 = arith.mulf %44, %44 : vector<128x16xf32>
    %48 = arith.addf %46, %47 : vector<128x16xf32>
    %cst_26 = arith.constant 5.000000e-01 : f32
    %49 = vector.broadcast %cst_26 : f32 to vector<128x16xf32>
    %50 = arith.mulf %49, %48 : vector<128x16xf32>
    %cst_27 = arith.constant -2.000000e+00 : f32
    %51 = vector.broadcast %cst_27 : f32 to vector<128x16xf32>
    %52 = arith.mulf %51, %31 : vector<128x16xf32>
    %53 = math.exp %52 : vector<128x16xf32>
    %54 = arith.mulf %50, %53 : vector<128x16xf32>
    %55 = arith.addf %45, %54 : vector<128x16xf32>
    %cst_28 = arith.constant 5.000000e-01 : f32
    %56 = vector.broadcast %cst_28 : f32 to vector<128x16xf32>
    %57 = arith.subf %55, %56 : vector<128x16xf32>
    %cst_29 = arith.constant dense<0.000000e+00> : vector<128xf32>
    %58 = vector.multi_reduction <add>, %57, %cst_29 [1] : vector<128x16xf32> to vector<128xf32>
    %59 = vector.shape_cast %58 : vector<128xf32> to vector<128x1xf32>
    %cst_30 = arith.constant -1.000000e+02 : f32
    %cst_31 = arith.constant 1.000000e+02 : f32
    %60 = vector.broadcast %cst_30 : f32 to vector<128x1xf32>
    %61 = arith.maximumf %60, %59 : vector<128x1xf32>
    %62 = vector.broadcast %cst_31 : f32 to vector<128x1xf32>
    %63 = arith.minimumf %62, %61 : vector<128x1xf32>
    %c0_32 = arith.constant 0 : index
    %c0_33 = arith.constant 0 : index
    %64 = vector.load %arg5[%c0_32, %c0_33] : memref<128x128xf32, #tpu.memory_space<vmem>>, vector<128x16xf32>
    tpu.vector_store %arg5[%c0_32, %c0_33], %35 {strides = array<i32>} : memref<128x128xf32, #tpu.memory_space<vmem>>, vector<128x16xf32>,
    %c0_34 = arith.constant 0 : index
    %c16 = arith.constant 16 : index
    %65 = vector.load %arg5[%c0_34, %c16] : memref<128x128xf32, #tpu.memory_space<vmem>>, vector<128x16xf32>
    tpu.vector_store %arg5[%c0_34, %c16], %43 {strides = array<i32>} : memref<128x128xf32, #tpu.memory_space<vmem>>, vector<128x16xf32>,
    %c0_35 = arith.constant 0 : index
    %c32 = arith.constant 32 : index
    %66 = vector.load %arg5[%c0_35, %c32] : memref<128x128xf32, #tpu.memory_space<vmem>>, vector<128x1xf32>
    tpu.vector_store %arg5[%c0_35, %c32], %63 {strides = array<i32>} : memref<128x128xf32, #tpu.memory_space<vmem>>, vector<128x1xf32>,
    %cst_36 = arith.constant 0.000000e+00 : f32
    %67 = vector.broadcast %cst_36 : f32 to vector<128x95xf32>
    %c0_37 = arith.constant 0 : index
    %c33 = arith.constant 33 : index
    %68 = vector.load %arg5[%c0_37, %c33] : memref<128x128xf32, #tpu.memory_space<vmem>>, vector<128x95xf32>
    tpu.vector_store %arg5[%c0_37, %c33], %67 {strides = array<i32>} : memref<128x128xf32, #tpu.memory_space<vmem>>, vector<128x95xf32>,
    return
  }
  func.func @transform_0(%arg0: i32) -> (i32, i32) {
    %c0_i32 = arith.constant 0 : i32
    %c0_i32_0 = arith.constant 0 : i32
    return %arg0, %c0_i32 : i32, i32
  }
  func.func @transform_1(%arg0: i32) -> (i32, i32) {
    %c0_i32 = arith.constant 0 : i32
    %c0_i32_0 = arith.constant 0 : i32
    return %arg0, %c0_i32 : i32, i32
  }
  func.func @transform_2(%arg0: i32) -> (i32, i32, i32) {
    %c0_i32 = arith.constant 0 : i32
    %c0_i32_0 = arith.constant 0 : i32
    %c0_i32_1 = arith.constant 0 : i32
    %c0_i32_2 = arith.constant 0 : i32
    return %c0_i32, %c0_i32_0, %c0_i32_1 : i32, i32, i32
  }
  func.func @transform_3(%arg0: i32) -> (i32, i32, i32) {
    %c0_i32 = arith.constant 0 : i32
    %c0_i32_0 = arith.constant 0 : i32
    %c0_i32_1 = arith.constant 0 : i32
    %c0_i32_2 = arith.constant 0 : i32
    return %c0_i32, %c0_i32_0, %c0_i32_1 : i32, i32, i32
  }
  func.func @transform_4(%arg0: i32) -> (i32, i32) {
    %c0_i32 = arith.constant 0 : i32
    %c0_i32_0 = arith.constant 0 : i32
    return %arg0, %c0_i32 : i32, i32
  }
}

</mosaic_0001>

<llo_original>
// kernel: skill_prior_policy_forward.1
$region0: #{skill_prior_policy_forward.1}
  #allocation0 [shape = 'u32[]', space=smem, size = 0x4, offset = 0x4, fixed_abs, tag = 'smem constant byte address 0x4 - core index']
  #allocation1 [shape = 'u32[144,128]{1,0:T(1,128)}', space=vmem, size = 0x12000, scoped, tag = 'internal scratch']
  %s0 = inlined_call_operand.vmem [shape: bf16[256,32], index: 0, kind: input, shape index: {}]
  %s1 = inlined_call_operand.vmem [shape: f32[256,16], index: 1, kind: input, shape index: {}]
  %s2 = inlined_call_operand.vmem [shape: bf16[3,128,128], index: 2, kind: input, shape index: {}]
  %s3 = inlined_call_operand.vmem [shape: f32[3,1,128], index: 3, kind: input, shape index: {}]
  %s4 = inlined_call_operand.vmem [shape: f32[256,128], index: 4, kind: output, shape index: {}]
  %s5 = sld [smem:[#allocation0]]
  $region49: #{skill_prior_policy_forward.1} parent=0
    _
  %s7 = ssub.s32 1, %s5
  %s8 = scalar_select 0, %s7, %s5
  loop: start=0, step=1, limit=4
  $region2: #{skill_prior_policy_forward.1} parent=0 // loop_pre_header
    _
  $region3: #{skill_prior_policy_forward.1} parent=0 // loop_header
    %s10 = sphi 0, %s14
    %p11 = scmp.ge.s32.totalorder %s10, 4
    %s20 = sphi 0, %s22
    %s23 = sphi 0, %s20
    %s24 = sphi 0, %s23
    %s40 = sphi 0, %s24
    %s46 = sphi 0, %s48
    %s49 = sphi 0, %s46
    %s50 = sphi 0, %s49
    %s66 = sphi 0, %s50
    %s70 = sphi 0, %s70
    %s72 = sphi 0, %s70
    %s73 = sphi 0, %s72
    %s87 = sphi 0, %s73
    %s91 = sphi 0, %s91
    %s93 = sphi 0, %s91
    %s94 = sphi 0, %s93
    %s108 = sphi 0, %s94
    %s114 = sphi 0, %s116
    %s117 = sphi 0, %s114
    %s118 = sphi 0, %s117
    %s134 = sphi 0, %s118
  $region4: #{skill_prior_policy_forward.1} parent=0 // loop_header_branch
    %13 = sbr.rel (%p11) target = $region8
  $region5: #{skill_prior_policy_forward.1} parent=0 // loop_body
    %s15 = ssub.s32 %s10, 1
    %s16 = ssub.s32 %s10, 2
    %s17 = sadd.s32 %s10, 1
    %s18 = ssub.s32 %s10, %s17
    %p19 = scmp.eq.s32.totalorder %s18, 0
    %s21 = sadd.s32 %s20, 1
    %s22 = scalar_select %p19, %s20, %s21
    %p25 = pneg %p19
    %p26 = scmp.eq.s32.totalorder %s10, 1
    %p27 = por %p25, %p26
    %p28 = scmp.ne.s32.totalorder %s20, %s23
    %p29 = scmp.eq.s32.totalorder %s10, 0
    %p30 = por %p28, %p29
    %p31 = scmp.ne.s32.totalorder %s20, %s23
    %p32 = scmp.eq.s32.totalorder %s15, 1
    %p33 = por %p31, %p32
    %p34 = scmp.ne.s32.totalorder %s23, %s24
    %p35 = scmp.eq.s32.totalorder %s15, 0
    %p36 = por %p34, %p35
    %p37 = scmp.ne.s32.totalorder %s23, %s24
    %p38 = scmp.eq.s32.totalorder %s16, 1
    %p39 = por %p37, %p38
    %p41 = scmp.ne.s32.totalorder %s24, %s40
    %p42 = scmp.eq.s32.totalorder %s16, 0
    %p43 = por %p41, %p42
    %s44 = ssub.s32 %s10, %s17
    %p45 = scmp.eq.s32.totalorder %s44, 0
    %s47 = sadd.s32 %s46, 1
    %s48 = scalar_select %p45, %s46, %s47
    %p51 = pneg %p45
    %p52 = scmp.eq.s32.totalorder %s10, 1
    %p53 = por %p51, %p52
    %p54 = scmp.ne.s32.totalorder %s46, %s49
    %p55 = scmp.eq.s32.totalorder %s10, 0
    %p56 = por %p54, %p55
    %p57 = scmp.ne.s32.totalorder %s46, %s49
    %p58 = scmp.eq.s32.totalorder %s15, 1
    %p59 = por %p57, %p58
    %p60 = scmp.ne.s32.totalorder %s49, %s50
    %p61 = scmp.eq.s32.totalorder %s15, 0
    %p62 = por %p60, %p61
    %p63 = scmp.ne.s32.totalorder %s49, %s50
    %p64 = scmp.eq.s32.totalorder %s16, 1
    %p65 = por %p63, %p64
    %p67 = scmp.ne.s32.totalorder %s50, %s66
    %p68 = scmp.eq.s32.totalorder %s16, 0
    %p69 = por %p67, %p68
    %s71 = sadd.s32 %s70, 1
    %p74 = scmp.eq.s32.totalorder %s10, 1
    %p75 = scmp.ne.s32.totalorder %s70, %s72
    %p76 = scmp.eq.s32.totalorder %s10, 0
    %p77 = por %p75, %p76
    %p78 = scmp.ne.s32.totalorder %s70, %s72
    %p79 = scmp.eq.s32.totalorder %s15, 1
    %p80 = por %p78, %p79
    %p81 = scmp.ne.s32.totalorder %s72, %s73
    %p82 = scmp.eq.s32.totalorder %s15, 0
    %p83 = por %p81, %p82
    %p84 = scmp.ne.s32.totalorder %s72, %s73
    %p85 = scmp.eq.s32.totalorder %s16, 1
    %p86 = por %p84, %p85
    %p88 = scmp.ne.s32.totalorder %s73, %s87
    %p89 = scmp.eq.s32.totalorder %s16, 0
    %p90 = por %p88, %p89
    %s92 = sadd.s32 %s91, 1
    %p95 = scmp.eq.s32.totalorder %s10, 1
    %p96 = scmp.ne.s32.totalorder %s91, %s93
    %p97 = scmp.eq.s32.totalorder %s10, 0
    %p98 = por %p96, %p97
    %p99 = scmp.ne.s32.totalorder %s91, %s93
    %p100 = scmp.eq.s32.totalorder %s15, 1
    %p101 = por %p99, %p100
    %p102 = scmp.ne.s32.totalorder %s93, %s94
    %p103 = scmp.eq.s32.totalorder %s15, 0
    %p104 = por %p102, %p103
    %p105 = scmp.ne.s32.totalorder %s93, %s94
    %p106 = scmp.eq.s32.totalorder %s16, 1
    %p107 = por %p105, %p106
    %p109 = scmp.ne.s32.totalorder %s94, %s108
    %p110 = scmp.eq.s32.totalorder %s16, 0
    %p111 = por %p109, %p110
    %s112 = ssub.s32 %s10, %s17
    %p113 = scmp.eq.s32.totalorder %s112, 0
    %s115 = sadd.s32 %s114, 1
    %s116 = scalar_select %p113, %s114, %s115
    %p119 = pneg %p113
    %p120 = scmp.eq.s32.totalorder %s10, 1
    %p121 = por %p119, %p120
    %p122 = scmp.ne.s32.totalorder %s114, %s117
    %p123 = scmp.eq.s32.totalorder %s10, 0
    %p124 = por %p122, %p123
    %p125 = scmp.ne.s32.totalorder %s114, %s117
    %p126 = scmp.eq.s32.totalorder %s15, 1
    %p127 = por %p125, %p126
    %p128 = scmp.ne.s32.totalorder %s117, %s118
    %p129 = scmp.eq.s32.totalorder %s15, 0
    %p130 = por %p128, %p129
    %p131 = scmp.ne.s32.totalorder %s117, %s118
    %p132 = scmp.eq.s32.totalorder %s16, 1
    %p133 = por %p131, %p132
    %p135 = scmp.ne.s32.totalorder %s118, %s134
    %p136 = scmp.eq.s32.totalorder %s16, 0
    %p137 = por %p135, %p136
    %p138 = scmp.le.s32.totalorder 1, %s10
    %p139 = scmp.lt.s32.totalorder %s10, 3
    %p140 = pnand %p138, %p139
    %p141 = pneg %p140
    // Predicated region
    $region9: #{skill_prior_policy_forward.1} parent=5 // pred_check
      _
    $region10: #{skill_prior_policy_forward.1} parent=5 // pred_check_branch
      %143 = sbr.rel (%p140) target = $region12
    $region11: #{skill_prior_policy_forward.1} parent=5 // pred_region
      %s144 = ssub.s32 %s10, 1
      // Predicated region
      $region13: #{skill_prior_policy_forward.1} parent=11 // pred_check
        %p145 = pneg %p83
      $region14: #{skill_prior_policy_forward.1} parent=11 // pred_check_branch
        %147 = sbr.rel (%p145) target = $region16
      $region15: #{skill_prior_policy_forward.1} parent=11 // pred_region
        _
      $region16: #{skill_prior_policy_forward.1} parent=11 // pred_fallthru
        _
      // Predicated region
      $region17: #{skill_prior_policy_forward.1} parent=11 // pred_check
        %p148 = pneg %p104
      $region18: #{skill_prior_policy_forward.1} parent=11 // pred_check_branch
        %150 = sbr.rel (%p148) target = $region20
      $region19: #{skill_prior_policy_forward.1} parent=11 // pred_region
        _
      $region20: #{skill_prior_policy_forward.1} parent=11 // pred_fallthru
        _
    $region12: #{skill_prior_policy_forward.1} parent=5 // pred_fallthru
      _
    %p151 = scmp.lt.s32.totalorder %s10, 2
    // Predicated region
    $region21: #{skill_prior_policy_forward.1} parent=5 // pred_check
      %p152 = pneg %p151
    $region22: #{skill_prior_policy_forward.1} parent=5 // pred_check_branch
      %154 = sbr.rel (%p152) target = $region24
    $region23: #{skill_prior_policy_forward.1} parent=5 // pred_region
      // Predicated region
      $region25: #{skill_prior_policy_forward.1} parent=23 // pred_check
        %p155 = pneg %p30
      $region26: #{skill_prior_policy_forward.1} parent=23 // pred_check_branch
        %157 = sbr.rel (%p155) target = $region28
      $region27: #{skill_prior_policy_forward.1} parent=23 // pred_region
        %s158 = smul.u32 16, %s10
        %p159 = scmp.lt.s32.totalorder %s158, 31
        %s160 = scalar_select %p159, %s158, 31
        %s161 = smul.addr %s160, 4
        %s162 = scalar_lea.vmem %s0, %s161
        %s163 = smul.u32 16, %s10
      $region28: #{skill_prior_policy_forward.1} parent=23 // pred_fallthru
        _
      // Predicated region
      $region29: #{skill_prior_policy_forward.1} parent=23 // pred_check
        %p164 = pneg %p56
      $region30: #{skill_prior_policy_forward.1} parent=23 // pred_check_branch
        %166 = sbr.rel (%p164) target = $region32
      $region31: #{skill_prior_policy_forward.1} parent=23 // pred_region
        %s167 = smul.u32 16, %s10
        %p168 = scmp.lt.s32.totalorder %s167, 31
        %s169 = scalar_select %p168, %s167, 31
        %s170 = smul.addr %s169, 8
        %s171 = scalar_lea.vmem %s1, %s170
        %s172 = smul.u32 16, %s10
      $region32: #{skill_prior_policy_forward.1} parent=23 // pred_fallthru
        _
    $region24: #{skill_prior_policy_forward.1} parent=5 // pred_fallthru
      _
    %p173 = scmp.le.s32.totalorder 1, %s10
    %p174 = scmp.lt.s32.totalorder %s10, 3
    %p175 = pnand %p173, %p174
    %p176 = pneg %p175
    // Predicated region
    $region33: #{skill_prior_policy_forward.1} parent=5 // pred_check
      _
    $region34: #{skill_prior_policy_forward.1} parent=5 // pred_check_branch
      %178 = sbr.rel (%p175) target = $region36
    $region35: #{skill_prior_policy_forward.1} parent=5 // pred_region
      %s179 = ssub.s32 %s10, 1
      %s180 = smul.u32 16, %s15
      %p181 = scmp.lt.s32.totalorder %s180, 31
      %s182 = scalar_select %p181, %s180, 31
      %s183 = smul.addr %s182, 4
      %s184 = scalar_lea.vmem %s0, %s183
      %p185 = pneg %p36
      %p186 = pneg %p33
      %s187 = smul.u32 16, %s15
      %p188 = scmp.lt.s32.totalorder %s187, 31
      %s189 = scalar_select %p188, %s187, 31
      %s190 = smul.addr %s189, 8
      %s191 = scalar_lea.vmem %s1, %s190
      %p192 = pneg %p62
      %p193 = pneg %p59
      %p194 = pneg %p83
      %p195 = pneg %p80
      %p196 = pneg %p104
      %p197 = pneg %p101
      %p198 = pneg %p130
      %p199 = pneg %p127
      %s200 = smul.u32 16, %s15
      %p201 = scmp.lt.s32.totalorder %s200, 31
      %s202 = scalar_select %p201, %s200, 31
      %s203 = smul.addr %s202, 8
      %s204 = scalar_lea.vmem %s4, %s203
      %s205 = smul.u32 16, %s15
      %p206 = scmp.lt.s32.totalorder %s205, 31
      %s207 = scalar_select %p206, %s205, 31
      %s208 = smul.addr %s207, 4
      %s209 = scalar_lea.vmem %s0, %s208
      %s210 = smul.u32 16, %s15
      %s211 = smul.u32 16, %s15
      %p212 = scmp.lt.s32.totalorder %s211, 31
      %s213 = scalar_select %p212, %s211, 31
      %s214 = smul.addr %s213, 8
      %s215 = scalar_lea.vmem %s1, %s214
      %s216 = smul.u32 16, %s15
      %s217 = smul.u32 16, %s15
      %p218 = scmp.lt.s32.totalorder %s217, 31
      %s219 = scalar_select %p218, %s217, 31
      %s220 = smul.addr %s219, 8
      %s221 = scalar_lea.vmem %s4, %s220
      %s222 = smul.u32 16, %s15
      %v224 = vld [vmem:[%s209] sm:$0xf]
      %v225 = vld [vmem:[%s209 + $0x4] sm:$0xf]
      %v226 = vld [vmem:[%s209 + $0x8] sm:$0xf]
      %v227 = vld [vmem:[%s209 + $0xc] sm:$0xf]
      %v228 = vld [vmem:[%s209 + $0x10] sm:$0xf]
      %v229 = vld [vmem:[%s209 + $0x14] sm:$0xf]
      %v230 = vld [vmem:[%s209 + $0x18] sm:$0xf]
      %v231 = vld [vmem:[%s209 + $0x1c] sm:$0xf]
      %v232 = vld [vmem:[%s209 + $0x20] sm:$0xf]
      %v233 = vld [vmem:[%s209 + $0x24] sm:$0xf]
      %v234 = vld [vmem:[%s209 + $0x28] sm:$0xf]
      %v235 = vld [vmem:[%s209 + $0x2c] sm:$0xf]
      %v236 = vld [vmem:[%s209 + $0x30] sm:$0xf]
      %v237 = vld [vmem:[%s209 + $0x34] sm:$0xf]
      %v238 = vld [vmem:[%s209 + $0x38] sm:$0xf]
      %v239 = vld [vmem:[%s209 + $0x3c] sm:$0xf]
      %v240 = vld [vmem:[%s2] sm:$0xf]
      %v241 = vld [vmem:[%s2 + $0x4] sm:$0xf]
      %v242 = vld [vmem:[%s2 + $0x8] sm:$0xf]
      %v243 = vld [vmem:[%s2 + $0xc] sm:$0xf]
      %v244 = vld [vmem:[%s3] sm:$0x1]
      %v246 = vlaneseq
      %v247 = vshrl.u32 %v246, 7
      %v248 = vsub.s32 0, %v247
      %v249 = vrot.slane %v244, %v248
      %v267 = vunpack.c.l.b16 %v224
      %v268 = vunpack.c.l.b16 %v225
      %v269 = vunpack.c.l.b16 %v226
      %v270 = vunpack.c.l.b16 %v227
      %v271 = vunpack.c.l.b16 %v228
      %v272 = vunpack.c.l.b16 %v229
      %v273 = vunpack.c.l.b16 %v230
      %v274 = vunpack.c.l.b16 %v231
      %v275 = vunpack.c.l.b16 %v232
      %v276 = vunpack.c.l.b16 %v233
      %v277 = vunpack.c.l.b16 %v234
      %v278 = vunpack.c.l.b16 %v235
      %v279 = vunpack.c.l.b16 %v236
      %v280 = vunpack.c.l.b16 %v237
      %v281 = vunpack.c.l.b16 %v238
      %v282 = vunpack.c.l.b16 %v239
      %v283 = vpack.c.b16 %v268, %v267
      %v284 = vpack.c.b16 %v270, %v269
      %v285 = vpack.c.b16 %v272, %v271
      %v286 = vpack.c.b16 %v274, %v273
      %v287 = vpack.c.b16 %v276, %v275
      %v288 = vpack.c.b16 %v278, %v277
      %v289 = vpack.c.b16 %v280, %v279
      %v290 = vpack.c.b16 %v282, %v281
      %v295 = vunpack.c.l.b16 %v240
      %v296 = vunpack.c.l.b16 %v241
      %v297 = vunpack.c.l.b16 %v242
      %v298 = vunpack.c.l.b16 %v243
      %v299 = vpack.c.b16 %v296, %v295
      %v300 = vpack.c.b16 %v298, %v297
      %vm303 = vcmask 261120
      %v305 = vsel %vm303, %v283, 0
      %v308 = vsel %vm303, %v284, 0
      %v311 = vsel %vm303, %v285, 0
      %v314 = vsel %vm303, %v286, 0
      %v317 = vsel %vm303, %v287, 0
      %v320 = vsel %vm303, %v288, 0
      %v323 = vsel %vm303, %v289, 0
      %v326 = vsel %vm303, %v290, 0
      %328 = vmatprep.subr.bf16.mxu0 0
      %329 = vmatpush1.bf16.msra.mxu0 %v299
      %330 = vmatprep.subr.bf16.mxu0 0
      %331 = vmatpush1.bf16.msra.mxu0 %v300
      %332 = vmatprep.subr.bf16.mxu0 0
      %333 = vmatpush1.bf16.msra.mxu0 0
      %334 = vmatprep.subr.bf16.mxu0 0
      %335 = vmatpush1.bf16.msra.mxu0 0
      %336 = vmatprep.subr.bf16.mxu0 0
      %337 = vmatpush1.bf16.msra.mxu0 0
      %338 = vmatprep.subr.bf16.mxu0 0
      %339 = vmatpush1.bf16.msra.mxu0 0
      %340 = vmatprep.subr.bf16.mxu0 0
      %341 = vmatpush1.bf16.msra.mxu0 0
      %342 = vmatprep.subr.bf16.mxu0 0
      %343 = vmatpush1.bf16.msra.mxu0 0
      %344 = vmatprep.subr.bf16.mxu0 0
      %345 = vmatpush1.bf16.msra.mxu0 0
      %346 = vmatprep.subr.bf16.mxu0 0
      %347 = vmatpush1.bf16.msra.mxu0 0
      %348 = vmatprep.subr.bf16.mxu0 0
      %349 = vmatpush1.bf16.msra.mxu0 0
      %350 = vmatprep.subr.bf16.mxu0 0
      %351 = vmatpush1.bf16.msra.mxu0 0
      %352 = vmatprep.subr.bf16.mxu0 0
      %353 = vmatpush1.bf16.msra.mxu0 0
      %354 = vmatprep.subr.bf16.mxu0 0
      %355 = vmatpush1.bf16.msra.mxu0 0
      %356 = vmatprep.subr.bf16.mxu0 0
      %357 = vmatpush1.bf16.msra.mxu0 0
      %358 = vmatprep.subr.bf16.mxu0 0
      %359 = vmatpush1.bf16.msra.mxu0 0
      %360 = vmatprep.mubr.bf16.mxu0 0
      %361 = vmatmul.mubr.bf16.gmra.mrb[0].mxu0 %v305
      %v362 = vpop.f32.mrb[0].mxu0
      %v363 = vadd.f32 %v249, %v362
      %v364 = vpop.f32.mrb[0].mxu0
      %v365 = vpop.f32.mrb[0].mxu0
      %v366 = vadd.f32 %v249, %v365
      %v367 = vpop.f32.mrb[0].mxu0
      %368 = vmatprep.mubr.bf16.mxu0 0
      %369 = vmatmul.mubr.bf16.gmra.mrb[0].mxu0 %v308
      %v370 = vpop.f32.mrb[0].mxu0
      %v371 = vadd.f32 %v249, %v370
      %v372 = vpop.f32.mrb[0].mxu0
      %v373 = vpop.f32.mrb[0].mxu0
      %v374 = vadd.f32 %v249, %v373
      %v375 = vpop.f32.mrb[0].mxu0
      %376 = vmatprep.mubr.bf16.mxu0 0
      %377 = vmatmul.mubr.bf16.gmra.mrb[0].mxu0 %v311
      %v378 = vpop.f32.mrb[0].mxu0
      %v379 = vadd.f32 %v249, %v378
      %v380 = vpop.f32.mrb[0].mxu0
      %v381 = vpop.f32.mrb[0].mxu0
      %v382 = vadd.f32 %v249, %v381
      %v383 = vpop.f32.mrb[0].mxu0
      %384 = vmatprep.mubr.bf16.mxu0 0
      %385 = vmatmul.mubr.bf16.gmra.mrb[0].mxu0 %v314
      %v386 = vpop.f32.mrb[0].mxu0
      %v387 = vadd.f32 %v249, %v386
      %v388 = vpop.f32.mrb[0].mxu0
      %v389 = vpop.f32.mrb[0].mxu0
      %v390 = vadd.f32 %v249, %v389
      %v391 = vpop.f32.mrb[0].mxu0
      %392 = vmatprep.mubr.bf16.mxu0 0
      %393 = vmatmul.mubr.bf16.gmra.mrb[0].mxu0 %v317
      %v394 = vpop.f32.mrb[0].mxu0
      %v395 = vadd.f32 %v249, %v394
      %v396 = vpop.f32.mrb[0].mxu0
      %v397 = vpop.f32.mrb[0].mxu0
      %v398 = vadd.f32 %v249, %v397
      %v399 = vpop.f32.mrb[0].mxu0
      %400 = vmatprep.mubr.bf16.mxu0 0
      %401 = vmatmul.mubr.bf16.gmra.mrb[0].mxu0 %v320
      %v402 = vpop.f32.mrb[0].mxu0
      %v403 = vadd.f32 %v249, %v402
      %v404 = vpop.f32.mrb[0].mxu0
      %v405 = vpop.f32.mrb[0].mxu0
      %v406 = vadd.f32 %v249, %v405
      %v407 = vpop.f32.mrb[0].mxu0
      %408 = vmatprep.mubr.bf16.mxu0 0
      %409 = vmatmul.mubr.bf16.gmra.mrb[0].mxu0 %v323
      %v410 = vpop.f32.mrb[0].mxu0
      %v411 = vadd.f32 %v249, %v410
      %v412 = vpop.f32.mrb[0].mxu0
      %v413 = vpop.f32.mrb[0].mxu0
      %v414 = vadd.f32 %v249, %v413
      %v415 = vpop.f32.mrb[0].mxu0
      %416 = vmatprep.mubr.bf16.mxu0 0
      %417 = vmatmul.mubr.bf16.gmra.mrb[0].mxu0 %v326
      %v418 = vpop.f32.mrb[0].mxu0
      %v419 = vadd.f32 %v249, %v418
      %v420 = vpop.f32.mrb[0].mxu0
      %v421 = vpop.f32.mrb[0].mxu0
      %v422 = vadd.f32 %v249, %v421
      %v423 = vpop.f32.mrb[0].mxu0
      %424 = vdwg.mxu0
      %v425 = vmax.f32 %v363, 0.0
      %v426 = vmax.f32 %v366, 0.0
      %v427 = vmax.f32 %v371, 0.0
      %v428 = vmax.f32 %v374, 0.0
      %v429 = vmax.f32 %v379, 0.0
      %v430 = vmax.f32 %v382, 0.0
      %v431 = vmax.f32 %v387, 0.0
      %v432 = vmax.f32 %v390, 0.0
      %v433 = vmax.f32 %v395, 0.0
      %v434 = vmax.f32 %v398, 0.0
      %v435 = vmax.f32 %v403, 0.0
      %v436 = vmax.f32 %v406, 0.0
      %v437 = vmax.f32 %v411, 0.0
      %v438 = vmax.f32 %v414, 0.0
      %v439 = vmax.f32 %v419, 0.0
      %v440 = vmax.f32 %v422, 0.0
      %v441 = vpack.c.bf16 %v426, %v425
      %v442 = vpack.c.bf16 %v428, %v427
      %v443 = vpack.c.bf16 %v430, %v429
      %v444 = vpack.c.bf16 %v432, %v431
      %v445 = vpack.c.bf16 %v434, %v433
      %v446 = vpack.c.bf16 %v436, %v435
      %v447 = vpack.c.bf16 %v438, %v437
      %v448 = vpack.c.bf16 %v440, %v439
      %s449 = scalar_lea.vmem %s2, 64
      %v450 = vld [vmem:[%s449] sm:$0xf]
      %v451 = vld [vmem:[%s449 + $0x4] sm:$0xf]
      %v452 = vld [vmem:[%s449 + $0x8] sm:$0xf]
      %v453 = vld [vmem:[%s449 + $0xc] sm:$0xf]
      %v454 = vld [vmem:[%s449 + $0x10] sm:$0xf]
      %v455 = vld [vmem:[%s449 + $0x14] sm:$0xf]
      %v456 = vld [vmem:[%s449 + $0x18] sm:$0xf]
      %v457 = vld [vmem:[%s449 + $0x1c] sm:$0xf]
      %v458 = vld [vmem:[%s449 + $0x20] sm:$0xf]
      %v459 = vld [vmem:[%s449 + $0x24] sm:$0xf]
      %v460 = vld [vmem:[%s449 + $0x28] sm:$0xf]
      %v461 = vld [vmem:[%s449 + $0x2c] sm:$0xf]
      %v462 = vld [vmem:[%s449 + $0x30] sm:$0xf]
      %v463 = vld [vmem:[%s449 + $0x34] sm:$0xf]
      %v464 = vld [vmem:[%s449 + $0x38] sm:$0xf]
      %v465 = vld [vmem:[%s449 + $0x3c] sm:$0xf]
      %s466 = scalar_lea.vmem %s3, 1
      %v467 = vld [vmem:[%s466] sm:$0x1]
      %v469 = vlaneseq
      %v470 = vshrl.u32 %v469, 7
      %v471 = vsub.s32 0, %v470
      %v472 = vrot.slane %v467, %v471
      %v490 = vunpack.c.l.b16 %v450
      %v491 = vunpack.c.l.b16 %v451
      %v492 = vunpack.c.l.b16 %v452
      %v493 = vunpack.c.l.b16 %v453
      %v494 = vunpack.c.l.b16 %v454
      %v495 = vunpack.c.l.b16 %v455
      %v496 = vunpack.c.l.b16 %v456
      %v497 = vunpack.c.l.b16 %v457
      %v498 = vunpack.c.l.b16 %v458
      %v499 = vunpack.c.l.b16 %v459
      %v500 = vunpack.c.l.b16 %v460
      %v501 = vunpack.c.l.b16 %v461
      %v502 = vunpack.c.l.b16 %v462
      %v503 = vunpack.c.l.b16 %v463
      %v504 = vunpack.c.l.b16 %v464
      %v505 = vunpack.c.l.b16 %v465
      %v506 = vpack.c.b16 %v491, %v490
      %v507 = vpack.c.b16 %v493, %v492
      %v508 = vpack.c.b16 %v495, %v494
      %v509 = vpack.c.b16 %v497, %v496
      %v510 = vpack.c.b16 %v499, %v498
      %v511 = vpack.c.b16 %v501, %v500
      %v512 = vpack.c.b16 %v503, %v502
      %v513 = vpack.c.b16 %v505, %v504
      %522 = vmatprep.subr.bf16.mxu0 0
      %523 = vmatpush1.bf16.msra.mxu0 %v506
      %524 = vmatprep.subr.bf16.mxu0 0
      %525 = vmatpush1.bf16.msra.mxu0 %v507
      %526 = vmatprep.subr.bf16.mxu0 0
      %527 = vmatpush1.bf16.msra.mxu0 %v508
      %528 = vmatprep.subr.bf16.mxu0 0
      %529 = vmatpush1.bf16.msra.mxu0 %v509
      %530 = vmatprep.subr.bf16.mxu0 0
      %531 = vmatpush1.bf16.msra.mxu0 %v510
      %532 = vmatprep.subr.bf16.mxu0 0
      %533 = vmatpush1.bf16.msra.mxu0 %v511
      %534 = vmatprep.subr.bf16.mxu0 0
      %535 = vmatpush1.bf16.msra.mxu0 %v512
      %536 = vmatprep.subr.bf16.mxu0 0
      %537 = vmatpush1.bf16.msra.mxu0 %v513
      %538 = vmatprep.subr.bf16.mxu0 0
      %539 = vmatpush1.bf16.msra.mxu0 0
      %540 = vmatprep.subr.bf16.mxu0 0
      %541 = vmatpush1.bf16.msra.mxu0 0
      %542 = vmatprep.subr.bf16.mxu0 0
      %543 = vmatpush1.bf16.msra.mxu0 0
      %544 = vmatprep.subr.bf16.mxu0 0
      %545 = vmatpush1.bf16.msra.mxu0 0
      %546 = vmatprep.subr.bf16.mxu0 0
      %547 = vmatpush1.bf16.msra.mxu0 0
      %548 = vmatprep.subr.bf16.mxu0 0
      %549 = vmatpush1.bf16.msra.mxu0 0
      %550 = vmatprep.subr.bf16.mxu0 0
      %551 = vmatpush1.bf16.msra.mxu0 0
      %552 = vmatprep.subr.bf16.mxu0 0
      %553 = vmatpush1.bf16.msra.mxu0 0
      %554 = vmatprep.mubr.bf16.mxu0 0
      %555 = vmatmul.mubr.bf16.gmra.mrb[0].mxu0 %v441
      %v556 = vpop.f32.mrb[0].mxu0
      %v557 = vadd.f32 %v472, %v556
      %v558 = vpop.f32.mrb[0].mxu0
      %v559 = vpop.f32.mrb[0].mxu0
      %v560 = vadd.f32 %v472, %v559
      %v561 = vpop.f32.mrb[0].mxu0
      %562 = vmatprep.mubr.bf16.mxu0 0
      %563 = vmatmul.mubr.bf16.gmra.mrb[0].mxu0 %v442
      %v564 = vpop.f32.mrb[0].mxu0
      %v565 = vadd.f32 %v472, %v564
      %v566 = vpop.f32.mrb[0].mxu0
      %v567 = vpop.f32.mrb[0].mxu0
      %v568 = vadd.f32 %v472, %v567
      %v569 = vpop.f32.mrb[0].mxu0
      %570 = vmatprep.mubr.bf16.mxu0 0
      %571 = vmatmul.mubr.bf16.gmra.mrb[0].mxu0 %v443
      %v572 = vpop.f32.mrb[0].mxu0
      %v573 = vadd.f32 %v472, %v572
      %v574 = vpop.f32.mrb[0].mxu0
      %v575 = vpop.f32.mrb[0].mxu0
      %v576 = vadd.f32 %v472, %v575
      %v577 = vpop.f32.mrb[0].mxu0
      %578 = vmatprep.mubr.bf16.mxu0 0
      %579 = vmatmul.mubr.bf16.gmra.mrb[0].mxu0 %v444
      %v580 = vpop.f32.mrb[0].mxu0
      %v581 = vadd.f32 %v472, %v580
      %v582 = vpop.f32.mrb[0].mxu0
      %v583 = vpop.f32.mrb[0].mxu0
      %v584 = vadd.f32 %v472, %v583
      %v585 = vpop.f32.mrb[0].mxu0
      %586 = vmatprep.mubr.bf16.mxu0 0
      %587 = vmatmul.mubr.bf16.gmra.mrb[0].mxu0 %v445
      %v588 = vpop.f32.mrb[0].mxu0
      %v589 = vadd.f32 %v472, %v588
      %v590 = vpop.f32.mrb[0].mxu0
      %v591 = vpop.f32.mrb[0].mxu0
      %v592 = vadd.f32 %v472, %v591
      %v593 = vpop.f32.mrb[0].mxu0
      %594 = vmatprep.mubr.bf16.mxu0 0
      %595 = vmatmul.mubr.bf16.gmra.mrb[0].mxu0 %v446
      %v596 = vpop.f32.mrb[0].mxu0
      %v597 = vadd.f32 %v472, %v596
      %v598 = vpop.f32.mrb[0].mxu0
      %v599 = vpop.f32.mrb[0].mxu0
      %v600 = vadd.f32 %v472, %v599
      %v601 = vpop.f32.mrb[0].mxu0
      %602 = vmatprep.mubr.bf16.mxu0 0
      %603 = vmatmul.mubr.bf16.gmra.mrb[0].mxu0 %v447
      %v604 = vpop.f32.mrb[0].mxu0
      %v605 = vadd.f32 %v472, %v604
      %v606 = vpop.f32.mrb[0].mxu0
      %v607 = vpop.f32.mrb[0].mxu0
      %v608 = vadd.f32 %v472, %v607
      %v609 = vpop.f32.mrb[0].mxu0
      %610 = vmatprep.mubr.bf16.mxu0 0
      %611 = vmatmul.mubr.bf16.gmra.mrb[0].mxu0 %v448
      %v612 = vpop.f32.mrb[0].mxu0
      %v613 = vadd.f32 %v472, %v612
      %v614 = vpop.f32.mrb[0].mxu0
      %v615 = vpop.f32.mrb[0].mxu0
      %v616 = vadd.f32 %v472, %v615
      %v617 = vpop.f32.mrb[0].mxu0
      %618 = vdwg.mxu0
      %v619 = vmax.f32 %v557, 0.0
      %v620 = vmax.f32 %v560, 0.0
      %v621 = vmax.f32 %v565, 0.0
      %v622 = vmax.f32 %v568, 0.0
      %v623 = vmax.f32 %v573, 0.0
      %v624 = vmax.f32 %v576, 0.0
      %v625 = vmax.f32 %v581, 0.0
      %v626 = vmax.f32 %v584, 0.0
      %v627 = vmax.f32 %v589, 0.0
      %v628 = vmax.f32 %v592, 0.0
      %v629 = vmax.f32 %v597, 0.0
      %v630 = vmax.f32 %v600, 0.0
      %v631 = vmax.f32 %v605, 0.0
      %v632 = vmax.f32 %v608, 0.0
      %v633 = vmax.f32 %v613, 0.0
      %v634 = vmax.f32 %v616, 0.0
      %v635 = vpack.c.bf16 %v620, %v619
      %v636 = vpack.c.bf16 %v622, %v621
      %v637 = vpack.c.bf16 %v624, %v623
      %v638 = vpack.c.bf16 %v626, %v625
      %v639 = vpack.c.bf16 %v628, %v627
      %v640 = vpack.c.bf16 %v630, %v629
      %v641 = vpack.c.bf16 %v632, %v631
      %v642 = vpack.c.bf16 %v634, %v633
      %s643 = scalar_lea.vmem %s2, 128
      %v644 = vld [vmem:[%s643] sm:$0xf]
      %v645 = vld [vmem:[%s643 + $0x4] sm:$0xf]
      %v646 = vld [vmem:[%s643 + $0x8] sm:$0xf]
      %v647 = vld [vmem:[%s643 + $0xc] sm:$0xf]
      %v648 = vld [vmem:[%s643 + $0x10] sm:$0xf]
      %v649 = vld [vmem:[%s643 + $0x14] sm:$0xf]
      %v650 = vld [vmem:[%s643 + $0x18] sm:$0xf]
      %v651 = vld [vmem:[%s643 + $0x1c] sm:$0xf]
      %v652 = vld [vmem:[%s643 + $0x20] sm:$0xf]
      %v653 = vld [vmem:[%s643 + $0x24] sm:$0xf]
      %v654 = vld [vmem:[%s643 + $0x28] sm:$0xf]
      %v655 = vld [vmem:[%s643 + $0x2c] sm:$0xf]
      %v656 = vld [vmem:[%s643 + $0x30] sm:$0xf]
      %v657 = vld [vmem:[%s643 + $0x34] sm:$0xf]
      %v658 = vld [vmem:[%s643 + $0x38] sm:$0xf]
      %v659 = vld [vmem:[%s643 + $0x3c] sm:$0xf]
      %s660 = scalar_lea.vmem %s3, 2
      %v661 = vld [vmem:[%s660] sm:$0x1]
      %v663 = vlaneseq
      %v664 = vshrl.u32 %v663, 7
      %v665 = vsub.s32 0, %v664
      %v666 = vrot.slane %v661, %v665
      %v684 = vunpack.c.l.b16 %v644
      %v685 = vunpack.c.l.b16 %v645
      %v686 = vunpack.c.l.b16 %v646
      %v687 = vunpack.c.l.b16 %v647
      %v688 = vunpack.c.l.b16 %v648
      %v689 = vunpack.c.l.b16 %v649
      %v690 = vunpack.c.l.b16 %v650
      %v691 = vunpack.c.l.b16 %v651
      %v692 = vunpack.c.l.b16 %v652
      %v693 = vunpack.c.l.b16 %v653
      %v694 = vunpack.c.l.b16 %v654
      %v695 = vunpack.c.l.b16 %v655
      %v696 = vunpack.c.l.b16 %v656
      %v697 = vunpack.c.l.b16 %v657
      %v698 = vunpack.c.l.b16 %v658
      %v699 = vunpack.c.l.b16 %v659
      %v700 = vpack.c.b16 %v685, %v684
      %v701 = vpack.c.b16 %v687, %v686
      %v702 = vpack.c.b16 %v689, %v688
      %v703 = vpack.c.b16 %v691, %v690
      %v704 = vpack.c.b16 %v693, %v692
      %v705 = vpack.c.b16 %v695, %v694
      %v706 = vpack.c.b16 %v697, %v696
      %v707 = vpack.c.b16 %v699, %v698
      %716 = vmatprep.subr.bf16.mxu0 0
      %717 = vmatpush1.bf16.msra.mxu0 %v700
      %718 = vmatprep.subr.bf16.mxu0 0
      %719 = vmatpush1.bf16.msra.mxu0 %v701
      %720 = vmatprep.subr.bf16.mxu0 0
      %721 = vmatpush1.bf16.msra.mxu0 %v702
      %722 = vmatprep.subr.bf16.mxu0 0
      %723 = vmatpush1.bf16.msra.mxu0 %v703
      %724 = vmatprep.subr.bf16.mxu0 0
      %725 = vmatpush1.bf16.msra.mxu0 %v704
      %726 = vmatprep.subr.bf16.mxu0 0
      %727 = vmatpush1.bf16.msra.mxu0 %v705
      %728 = vmatprep.subr.bf16.mxu0 0
      %729 = vmatpush1.bf16.msra.mxu0 %v706
      %730 = vmatprep.subr.bf16.mxu0 0
      %731 = vmatpush1.bf16.msra.mxu0 %v707
      %732 = vmatprep.subr.bf16.mxu0 0
      %733 = vmatpush1.bf16.msra.mxu0 0
      %734 = vmatprep.subr.bf16.mxu0 0
      %735 = vmatpush1.bf16.msra.mxu0 0
      %736 = vmatprep.subr.bf16.mxu0 0
      %737 = vmatpush1.bf16.msra.mxu0 0
      %738 = vmatprep.subr.bf16.mxu0 0
      %739 = vmatpush1.bf16.msra.mxu0 0
      %740 = vmatprep.subr.bf16.mxu0 0
      %741 = vmatpush1.bf16.msra.mxu0 0
      %742 = vmatprep.subr.bf16.mxu0 0
      %743 = vmatpush1.bf16.msra.mxu0 0
      %744 = vmatprep.subr.bf16.mxu0 0
      %745 = vmatpush1.bf16.msra.mxu0 0
      %746 = vmatprep.subr.bf16.mxu0 0
      %747 = vmatpush1.bf16.msra.mxu0 0
      %748 = vmatprep.mubr.bf16.mxu0 0
      %749 = vmatmul.mubr.bf16.gmra.mrb[0].mxu0 %v635
      %v750 = vpop.f32.mrb[0].mxu0
      %v751 = vadd.f32 %v666, %v750
      %v752 = vpop.f32.mrb[0].mxu0
      %v753 = vpop.f32.mrb[0].mxu0
      %v754 = vadd.f32 %v666, %v753
      %v755 = vpop.f32.mrb[0].mxu0
      %756 = vmatprep.mubr.bf16.mxu0 0
      %757 = vmatmul.mubr.bf16.gmra.mrb[0].mxu0 %v636
      %v758 = vpop.f32.mrb[0].mxu0
      %v759 = vadd.f32 %v666, %v758
      %v760 = vpop.f32.mrb[0].mxu0
      %v761 = vpop.f32.mrb[0].mxu0
      %v762 = vadd.f32 %v666, %v761
      %v763 = vpop.f32.mrb[0].mxu0
      %764 = vmatprep.mubr.bf16.mxu0 0
      %765 = vmatmul.mubr.bf16.gmra.mrb[0].mxu0 %v637
      %v766 = vpop.f32.mrb[0].mxu0
      %v767 = vadd.f32 %v666, %v766
      %v768 = vpop.f32.mrb[0].mxu0
      %v769 = vpop.f32.mrb[0].mxu0
      %v770 = vadd.f32 %v666, %v769
      %v771 = vpop.f32.mrb[0].mxu0
      %772 = vmatprep.mubr.bf16.mxu0 0
      %773 = vmatmul.mubr.bf16.gmra.mrb[0].mxu0 %v638
      %v774 = vpop.f32.mrb[0].mxu0
      %v775 = vadd.f32 %v666, %v774
      %v776 = vpop.f32.mrb[0].mxu0
      %v777 = vpop.f32.mrb[0].mxu0
      %v778 = vadd.f32 %v666, %v777
      %v779 = vpop.f32.mrb[0].mxu0
      %780 = vmatprep.mubr.bf16.mxu0 0
      %781 = vmatmul.mubr.bf16.gmra.mrb[0].mxu0 %v639
      %v782 = vpop.f32.mrb[0].mxu0
      %v783 = vadd.f32 %v666, %v782
      %v784 = vpop.f32.mrb[0].mxu0
      %v785 = vpop.f32.mrb[0].mxu0
      %v786 = vadd.f32 %v666, %v785
      %v787 = vpop.f32.mrb[0].mxu0
      %788 = vmatprep.mubr.bf16.mxu0 0
      %789 = vmatmul.mubr.bf16.gmra.mrb[0].mxu0 %v640
      %v790 = vpop.f32.mrb[0].mxu0
      %v791 = vadd.f32 %v666, %v790
      %v792 = vpop.f32.mrb[0].mxu0
      %v793 = vpop.f32.mrb[0].mxu0
      %v794 = vadd.f32 %v666, %v793
      %v795 = vpop.f32.mrb[0].mxu0
      %796 = vmatprep.mubr.bf16.mxu0 0
      %797 = vmatmul.mubr.bf16.gmra.mrb[0].mxu0 %v641
      %v798 = vpop.f32.mrb[0].mxu0
      %v799 = vadd.f32 %v666, %v798
      %v800 = vpop.f32.mrb[0].mxu0
      %v801 = vpop.f32.mrb[0].mxu0
      %v802 = vadd.f32 %v666, %v801
      %v803 = vpop.f32.mrb[0].mxu0
      %804 = vmatprep.mubr.bf16.mxu0 0
      %805 = vmatmul.mubr.bf16.gmra.mrb[0].mxu0 %v642
      %v806 = vpop.f32.mrb[0].mxu0
      %v807 = vadd.f32 %v666, %v806
      %v808 = vpop.f32.mrb[0].mxu0
      %v809 = vpop.f32.mrb[0].mxu0
      %v810 = vadd.f32 %v666, %v809
      %v811 = vpop.f32.mrb[0].mxu0
      %812 = vdwg.mxu0
      %v813 = vld [vmem:[%s215] sm:$0xff]
      %v814 = vld [vmem:[%s215 + $0x8] sm:$0xff]
      %v815 = vld [vmem:[%s215 + $0x10] sm:$0xff]
      %v816 = vld [vmem:[%s215 + $0x18] sm:$0xff]
      %v817 = vld [vmem:[%s215 + $0x20] sm:$0xff]
      %v818 = vld [vmem:[%s215 + $0x28] sm:$0xff]
      %v819 = vld [vmem:[%s215 + $0x30] sm:$0xff]
      %v820 = vld [vmem:[%s215 + $0x38] sm:$0xff]
      %v821 = vld [vmem:[%s215 + $0x40] sm:$0xff]
      %v822 = vld [vmem:[%s215 + $0x48] sm:$0xff]
      %v823 = vld [vmem:[%s215 + $0x50] sm:$0xff]
      %v824 = vld [vmem:[%s215 + $0x58] sm:$0xff]
      %v825 = vld [vmem:[%s215 + $0x60] sm:$0xff]
      %v826 = vld [vmem:[%s215 + $0x68] sm:$0xff]
      %v827 = vld [vmem:[%s215 + $0x70] sm:$0xff]
      %v828 = vld [vmem:[%s215 + $0x78] sm:$0xff]
      %v829 = vmul.f32 %v751, 1.442695
      %v830 = vpow.pop %v829
      %v831 = vmul.f32 %v754, 1.442695
      %v832 = vpow.pop %v831
      %v833 = vmul.f32 %v759, 1.442695
      %v834 = vpow.pop %v833
      %v835 = vmul.f32 %v762, 1.442695
      %v836 = vpow.pop %v835
      %v837 = vmul.f32 %v767, 1.442695
      %v838 = vpow.pop %v837
      %v839 = vmul.f32 %v770, 1.442695
      %v840 = vpow.pop %v839
      %v841 = vmul.f32 %v775, 1.442695
      %v842 = vpow.pop %v841
      %v843 = vmul.f32 %v778, 1.442695
      %v844 = vpow.pop %v843
      %v845 = vmul.f32 %v783, 1.442695
      %v846 = vpow.pop %v845
      %v847 = vmul.f32 %v786, 1.442695
      %v848 = vpow.pop %v847
      %v849 = vmul.f32 %v791, 1.442695
      %v850 = vpow.pop %v849
      %v851 = vmul.f32 %v794, 1.442695
      %v852 = vpow.pop %v851
      %v853 = vmul.f32 %v799, 1.442695
      %v854 = vpow.pop %v853
      %v855 = vmul.f32 %v802, 1.442695
      %v856 = vpow.pop %v855
      %v857 = vmul.f32 %v807, 1.442695
      %v858 = vpow.pop %v857
      %v859 = vmul.f32 %v810, 1.442695
      %v860 = vpow.pop %v859
      %877 = vrot.lane.b32.xlu0 %v813, 16
      %v878 = vpop.permute.xlu0 %877
      %879 = vrot.lane.b32.xlu0 %v814, 16
      %v880 = vpop.permute.xlu0 %879
      %881 = vrot.lane.b32.xlu0 %v815, 16
      %v882 = vpop.permute.xlu0 %881
      %883 = vrot.lane.b32.xlu0 %v816, 16
      %v884 = vpop.permute.xlu0 %883
      %885 = vrot.lane.b32.xlu0 %v817, 16
      %v886 = vpop.permute.xlu0 %885
      %887 = vrot.lane.b32.xlu0 %v818, 16
      %v888 = vpop.permute.xlu0 %887
      %889 = vrot.lane.b32.xlu0 %v819, 16
      %v890 = vpop.permute.xlu0 %889
      %891 = vrot.lane.b32.xlu0 %v820, 16
      %v892 = vpop.permute.xlu0 %891
      %893 = vrot.lane.b32.xlu0 %v821, 16
      %v894 = vpop.permute.xlu0 %893
      %895 = vrot.lane.b32.xlu0 %v822, 16
      %v896 = vpop.permute.xlu0 %895
      %897 = vrot.lane.b32.xlu0 %v823, 16
      %v898 = vpop.permute.xlu0 %897
      %899 = vrot.lane.b32.xlu0 %v824, 16
      %v900 = vpop.permute.xlu0 %899
      %901 = vrot.lane.b32.xlu0 %v825, 16
      %v902 = vpop.permute.xlu0 %901
      %903 = vrot.lane.b32.xlu0 %v826, 16
      %v904 = vpop.permute.xlu0 %903
      %905 = vrot.lane.b32.xlu0 %v827, 16
      %v906 = vpop.permute.xlu0 %905
      %907 = vrot.lane.b32.xlu0 %v828, 16
      %v908 = vpop.permute.xlu0 %907
      %v925 = vmul.f32 %v830, %v878
      %v926 = vmul.f32 %v832, %v880
      %v927 = vmul.f32 %v834, %v882
      %v928 = vmul.f32 %v836, %v884
      %v929 = vmul.f32 %v838, %v886
      %v930 = vmul.f32 %v840, %v888
      %v931 = vmul.f32 %v842, %v890
      %v932 = vmul.f32 %v844, %v892
      %v933 = vmul.f32 %v846, %v894
      %v934 = vmul.f32 %v848, %v896
      %v935 = vmul.f32 %v850, %v898
      %v936 = vmul.f32 %v852, %v900
      %v937 = vmul.f32 %v854, %v902
      %v938 = vmul.f32 %v856, %v904
      %v939 = vmul.f32 %v858, %v906
      %v940 = vmul.f32 %v860, %v908
      %957 = vrot.lane.b32.xlu0 %v925, 112
      %v958 = vpop.permute.xlu0 %957
      %959 = vrot.lane.b32.xlu0 %v926, 112
      %v960 = vpop.permute.xlu0 %959
      %961 = vrot.lane.b32.xlu0 %v927, 112
      %v962 = vpop.permute.xlu0 %961
      %963 = vrot.lane.b32.xlu0 %v928, 112
      %v964 = vpop.permute.xlu0 %963
      %965 = vrot.lane.b32.xlu0 %v929, 112
      %v966 = vpop.permute.xlu0 %965
      %967 = vrot.lane.b32.xlu0 %v930, 112
      %v968 = vpop.permute.xlu0 %967
      %969 = vrot.lane.b32.xlu0 %v931, 112
      %v970 = vpop.permute.xlu0 %969
      %971 = vrot.lane.b32.xlu0 %v932, 112
      %v972 = vpop.permute.xlu0 %971
      %973 = vrot.lane.b32.xlu0 %v933, 112
      %v974 = vpop.permute.xlu0 %973
      %975 = vrot.lane.b32.xlu0 %v934, 112
      %v976 = vpop.permute.xlu0 %975
      %977 = vrot.lane.b32.xlu0 %v935, 112
      %v978 = vpop.permute.xlu0 %977
      %979 = vrot.lane.b32.xlu0 %v936, 112
      %v980 = vpop.permute.xlu0 %979
      %981 = vrot.lane.b32.xlu0 %v937, 112
      %v982 = vpop.permute.xlu0 %981
      %983 = vrot.lane.b32.xlu0 %v938, 112
      %v984 = vpop.permute.xlu0 %983
      %985 = vrot.lane.b32.xlu0 %v939, 112
      %v986 = vpop.permute.xlu0 %985
      %987 = vrot.lane.b32.xlu0 %v940, 112
      %v988 = vpop.permute.xlu0 %987
      %v1005 = vadd.f32 %v751, %v958
      %v1006 = vadd.f32 %v754, %v960
      %v1007 = vadd.f32 %v759, %v962
      %v1008 = vadd.f32 %v762, %v964
      %v1009 = vadd.f32 %v767, %v966
      %v1010 = vadd.f32 %v770, %v968
      %v1011 = vadd.f32 %v775, %v970
      %v1012 = vadd.f32 %v778, %v972
      %v1013 = vadd.f32 %v783, %v974
      %v1014 = vadd.f32 %v786, %v976
      %v1015 = vadd.f32 %v791, %v978
      %v1016 = vadd.f32 %v794, %v980
      %v1017 = vadd.f32 %v799, %v982
      %v1018 = vadd.f32 %v802, %v984
      %v1019 = vadd.f32 %v807, %v986
      %v1020 = vadd.f32 %v810, %v988
      %v1021 = vmul.f32 %v813, %v813
      %v1022 = vmul.f32 %v814, %v814
      %v1023 = vmul.f32 %v815, %v815
      %v1024 = vmul.f32 %v816, %v816
      %v1025 = vmul.f32 %v817, %v817
      %v1026 = vmul.f32 %v818, %v818
      %v1027 = vmul.f32 %v819, %v819
      %v1028 = vmul.f32 %v820, %v820
      %v1029 = vmul.f32 %v821, %v821
      %v1030 = vmul.f32 %v822, %v822
      %v1031 = vmul.f32 %v823, %v823
      %v1032 = vmul.f32 %v824, %v824
      %v1033 = vmul.f32 %v825, %v825
      %v1034 = vmul.f32 %v826, %v826
      %v1035 = vmul.f32 %v827, %v827
      %v1036 = vmul.f32 %v828, %v828
      %v1037 = vmul.f32 %v751, 2.0
      %v1038 = vmul.f32 %v754, 2.0
      %v1039 = vmul.f32 %v759, 2.0
      %v1040 = vmul.f32 %v762, 2.0
      %v1041 = vmul.f32 %v767, 2.0
      %v1042 = vmul.f32 %v770, 2.0
      %v1043 = vmul.f32 %v775, 2.0
      %v1044 = vmul.f32 %v778, 2.0
      %v1045 = vmul.f32 %v783, 2.0
      %v1046 = vmul.f32 %v786, 2.0
      %v1047 = vmul.f32 %v791, 2.0
      %v1048 = vmul.f32 %v794, 2.0
      %v1049 = vmul.f32 %v799, 2.0
      %v1050 = vmul.f32 %v802, 2.0
      %v1051 = vmul.f32 %v807, 2.0
      %v1052 = vmul.f32 %v810, 2.0
      %1069 = vrot.lane.b32.xlu0 %v1037, 112
      %v1070 = vpop.permute.xlu0 %1069
      %1071 = vrot.lane.b32.xlu0 %v1038, 112
      %v1072 = vpop.permute.xlu0 %1071
      %1073 = vrot.lane.b32.xlu0 %v1039, 112
      %v1074 = vpop.permute.xlu0 %1073
      %1075 = vrot.lane.b32.xlu0 %v1040, 112
      %v1076 = vpop.permute.xlu0 %1075
      %1077 = vrot.lane.b32.xlu0 %v1041, 112
      %v1078 = vpop.permute.xlu0 %1077
      %1079 = vrot.lane.b32.xlu0 %v1042, 112
      %v1080 = vpop.permute.xlu0 %1079
      %1081 = vrot.lane.b32.xlu0 %v1043, 112
      %v1082 = vpop.permute.xlu0 %1081
      %1083 = vrot.lane.b32.xlu0 %v1044, 112
      %v1084 = vpop.permute.xlu0 %1083
      %1085 = vrot.lane.b32.xlu0 %v1045, 112
      %v1086 = vpop.permute.xlu0 %1085
      %1087 = vrot.lane.b32.xlu0 %v1046, 112
      %v1088 = vpop.permute.xlu0 %1087
      %1089 = vrot.lane.b32.xlu0 %v1047, 112
      %v1090 = vpop.permute.xlu0 %1089
      %1091 = vrot.lane.b32.xlu0 %v1048, 112
      %v1092 = vpop.permute.xlu0 %1091
      %1093 = vrot.lane.b32.xlu0 %v1049, 112
      %v1094 = vpop.permute.xlu0 %1093
      %1095 = vrot.lane.b32.xlu0 %v1050, 112
      %v1096 = vpop.permute.xlu0 %1095
      %1097 = vrot.lane.b32.xlu0 %v1051, 112
      %v1098 = vpop.permute.xlu0 %1097
      %1099 = vrot.lane.b32.xlu0 %v1052, 112
      %v1100 = vpop.permute.xlu0 %1099
      %v1117 = vadd.f32 %v1021, %v1070
      %v1118 = vadd.f32 %v1022, %v1072
      %v1119 = vadd.f32 %v1023, %v1074
      %v1120 = vadd.f32 %v1024, %v1076
      %v1121 = vadd.f32 %v1025, %v1078
      %v1122 = vadd.f32 %v1026, %v1080
      %v1123 = vadd.f32 %v1027, %v1082
      %v1124 = vadd.f32 %v1028, %v1084
      %v1125 = vadd.f32 %v1029, %v1086
      %v1126 = vadd.f32 %v1030, %v1088
      %v1127 = vadd.f32 %v1031, %v1090
      %v1128 = vadd.f32 %v1032, %v1092
      %v1129 = vadd.f32 %v1033, %v1094
      %v1130 = vadd.f32 %v1034, %v1096
      %v1131 = vadd.f32 %v1035, %v1098
      %v1132 = vadd.f32 %v1036, %v1100
      %v1133 = vadd.f32 %v1117, 1.837877
      %v1134 = vadd.f32 %v1118, 1.837877
      %v1135 = vadd.f32 %v1119, 1.837877
      %v1136 = vadd.f32 %v1120, 1.837877
      %v1137 = vadd.f32 %v1121, 1.837877
      %v1138 = vadd.f32 %v1122, 1.837877
      %v1139 = vadd.f32 %v1123, 1.837877
      %v1140 = vadd.f32 %v1124, 1.837877
      %v1141 = vadd.f32 %v1125, 1.837877
      %v1142 = vadd.f32 %v1126, 1.837877
      %v1143 = vadd.f32 %v1127, 1.837877
      %v1144 = vadd.f32 %v1128, 1.837877
      %v1145 = vadd.f32 %v1129, 1.837877
      %v1146 = vadd.f32 %v1130, 1.837877
      %v1147 = vadd.f32 %v1131, 1.837877
      %v1148 = vadd.f32 %v1132, 1.837877
      %v1149 = vmul.f32 %v1133, -0.5
      %v1150 = vmul.f32 %v1134, -0.5
      %v1151 = vmul.f32 %v1135, -0.5
      %v1152 = vmul.f32 %v1136, -0.5
      %v1153 = vmul.f32 %v1137, -0.5
      %v1154 = vmul.f32 %v1138, -0.5
      %v1155 = vmul.f32 %v1139, -0.5
      %v1156 = vmul.f32 %v1140, -0.5
      %v1157 = vmul.f32 %v1141, -0.5
      %v1158 = vmul.f32 %v1142, -0.5
      %v1159 = vmul.f32 %v1143, -0.5
      %v1160 = vmul.f32 %v1144, -0.5
      %v1161 = vmul.f32 %v1145, -0.5
      %v1162 = vmul.f32 %v1146, -0.5
      %v1163 = vmul.f32 %v1147, -0.5
      %v1164 = vmul.f32 %v1148, -0.5
      %1181 = vrot.lane.b32.xlu0 %v751, 96
      %v1182 = vpop.permute.xlu0 %1181
      %1183 = vrot.lane.b32.xlu0 %v754, 96
      %v1184 = vpop.permute.xlu0 %1183
      %1185 = vrot.lane.b32.xlu0 %v759, 96
      %v1186 = vpop.permute.xlu0 %1185
      %1187 = vrot.lane.b32.xlu0 %v762, 96
      %v1188 = vpop.permute.xlu0 %1187
      %1189 = vrot.lane.b32.xlu0 %v767, 96
      %v1190 = vpop.permute.xlu0 %1189
      %1191 = vrot.lane.b32.xlu0 %v770, 96
      %v1192 = vpop.permute.xlu0 %1191
      %1193 = vrot.lane.b32.xlu0 %v775, 96
      %v1194 = vpop.permute.xlu0 %1193
      %1195 = vrot.lane.b32.xlu0 %v778, 96
      %v1196 = vpop.permute.xlu0 %1195
      %1197 = vrot.lane.b32.xlu0 %v783, 96
      %v1198 = vpop.permute.xlu0 %1197
      %1199 = vrot.lane.b32.xlu0 %v786, 96
      %v1200 = vpop.permute.xlu0 %1199
      %1201 = vrot.lane.b32.xlu0 %v791, 96
      %v1202 = vpop.permute.xlu0 %1201
      %1203 = vrot.lane.b32.xlu0 %v794, 96
      %v1204 = vpop.permute.xlu0 %1203
      %1205 = vrot.lane.b32.xlu0 %v799, 96
      %v1206 = vpop.permute.xlu0 %1205
      %1207 = vrot.lane.b32.xlu0 %v802, 96
      %v1208 = vpop.permute.xlu0 %1207
      %1209 = vrot.lane.b32.xlu0 %v807, 96
      %v1210 = vpop.permute.xlu0 %1209
      %1211 = vrot.lane.b32.xlu0 %v810, 96
      %v1212 = vpop.permute.xlu0 %1211
      %v1229 = vsub.f32 %v751, %v1182
      %v1230 = vsub.f32 %v754, %v1184
      %v1231 = vsub.f32 %v759, %v1186
      %v1232 = vsub.f32 %v762, %v1188
      %v1233 = vsub.f32 %v767, %v1190
      %v1234 = vsub.f32 %v770, %v1192
      %v1235 = vsub.f32 %v775, %v1194
      %v1236 = vsub.f32 %v778, %v1196
      %v1237 = vsub.f32 %v783, %v1198
      %v1238 = vsub.f32 %v786, %v1200
      %v1239 = vsub.f32 %v791, %v1202
      %v1240 = vsub.f32 %v794, %v1204
      %v1241 = vsub.f32 %v799, %v1206
      %v1242 = vsub.f32 %v802, %v1208
      %v1243 = vsub.f32 %v807, %v1210
      %v1244 = vsub.f32 %v810, %v1212
      %1245 = vrot.lane.b32.xlu0 %v751, 32
      %v1246 = vpop.permute.xlu0 %1245
      %1247 = vrot.lane.b32.xlu0 %v754, 32
      %v1248 = vpop.permute.xlu0 %1247
      %1249 = vrot.lane.b32.xlu0 %v759, 32
      %v1250 = vpop.permute.xlu0 %1249
      %1251 = vrot.lane.b32.xlu0 %v762, 32
      %v1252 = vpop.permute.xlu0 %1251
      %1253 = vrot.lane.b32.xlu0 %v767, 32
      %v1254 = vpop.permute.xlu0 %1253
      %1255 = vrot.lane.b32.xlu0 %v770, 32
      %v1256 = vpop.permute.xlu0 %1255
      %1257 = vrot.lane.b32.xlu0 %v775, 32
      %v1258 = vpop.permute.xlu0 %1257
      %1259 = vrot.lane.b32.xlu0 %v778, 32
      %v1260 = vpop.permute.xlu0 %1259
      %1261 = vrot.lane.b32.xlu0 %v783, 32
      %v1262 = vpop.permute.xlu0 %1261
      %1263 = vrot.lane.b32.xlu0 %v786, 32
      %v1264 = vpop.permute.xlu0 %1263
      %1265 = vrot.lane.b32.xlu0 %v791, 32
      %v1266 = vpop.permute.xlu0 %1265
      %1267 = vrot.lane.b32.xlu0 %v794, 32
      %v1268 = vpop.permute.xlu0 %1267
      %1269 = vrot.lane.b32.xlu0 %v799, 32
      %v1270 = vpop.permute.xlu0 %1269
      %1271 = vrot.lane.b32.xlu0 %v802, 32
      %v1272 = vpop.permute.xlu0 %1271
      %1273 = vrot.lane.b32.xlu0 %v807, 32
      %v1274 = vpop.permute.xlu0 %1273
      %1275 = vrot.lane.b32.xlu0 %v810, 32
      %v1276 = vpop.permute.xlu0 %1275
      %v1293 = vsub.f32 %v751, %v1246
      %v1294 = vsub.f32 %v754, %v1248
      %v1295 = vsub.f32 %v759, %v1250
      %v1296 = vsub.f32 %v762, %v1252
      %v1297 = vsub.f32 %v767, %v1254
      %v1298 = vsub.f32 %v770, %v1256
      %v1299 = vsub.f32 %v775, %v1258
      %v1300 = vsub.f32 %v778, %v1260
      %v1301 = vsub.f32 %v783, %v1262
      %v1302 = vsub.f32 %v786, %v1264
      %v1303 = vsub.f32 %v791, %v1266
      %v1304 = vsub.f32 %v794, %v1268
      %v1305 = vsub.f32 %v799, %v1270
      %v1306 = vsub.f32 %v802, %v1272
      %v1307 = vsub.f32 %v807, %v1274
      %v1308 = vsub.f32 %v810, %v1276
      %v1309 = vmul.f32 %v830, %v830
      %v1310 = vmul.f32 %v832, %v832
      %v1311 = vmul.f32 %v834, %v834
      %v1312 = vmul.f32 %v836, %v836
      %v1313 = vmul.f32 %v838, %v838
      %v1314 = vmul.f32 %v840, %v840
      %v1315 = vmul.f32 %v842, %v842
      %v1316 = vmul.f32 %v844, %v844
      %v1317 = vmul.f32 %v846, %v846
      %v1318 = vmul.f32 %v848, %v848
      %v1319 = vmul.f32 %v850, %v850
      %v1320 = vmul.f32 %v852, %v852
      %v1321 = vmul.f32 %v854, %v854
      %v1322 = vmul.f32 %v856, %v856
      %v1323 = vmul.f32 %v858, %v858
      %v1324 = vmul.f32 %v860, %v860
      %v1325 = vmul.f32 %v1229, %v1229
      %v1326 = vmul.f32 %v1230, %v1230
      %v1327 = vmul.f32 %v1231, %v1231
      %v1328 = vmul.f32 %v1232, %v1232
      %v1329 = vmul.f32 %v1233, %v1233
      %v1330 = vmul.f32 %v1234, %v1234
      %v1331 = vmul.f32 %v1235, %v1235
      %v1332 = vmul.f32 %v1236, %v1236
      %v1333 = vmul.f32 %v1237, %v1237
      %v1334 = vmul.f32 %v1238, %v1238
      %v1335 = vmul.f32 %v1239, %v1239
      %v1336 = vmul.f32 %v1240, %v1240
      %v1337 = vmul.f32 %v1241, %v1241
      %v1338 = vmul.f32 %v1242, %v1242
      %v1339 = vmul.f32 %v1243, %v1243
      %v1340 = vmul.f32 %v1244, %v1244
      %1357 = vrot.lane.b32.xlu0 %v1325, 16
      %v1358 = vpop.permute.xlu0 %1357
      %1359 = vrot.lane.b32.xlu0 %v1326, 16
      %v1360 = vpop.permute.xlu0 %1359
      %1361 = vrot.lane.b32.xlu0 %v1327, 16
      %v1362 = vpop.permute.xlu0 %1361
      %1363 = vrot.lane.b32.xlu0 %v1328, 16
      %v1364 = vpop.permute.xlu0 %1363
      %1365 = vrot.lane.b32.xlu0 %v1329, 16
      %v1366 = vpop.permute.xlu0 %1365
      %1367 = vrot.lane.b32.xlu0 %v1330, 16
      %v1368 = vpop.permute.xlu0 %1367
      %1369 = vrot.lane.b32.xlu0 %v1331, 16
      %v1370 = vpop.permute.xlu0 %1369
      %1371 = vrot.lane.b32.xlu0 %v1332, 16
      %v1372 = vpop.permute.xlu0 %1371
      %1373 = vrot.lane.b32.xlu0 %v1333, 16
      %v1374 = vpop.permute.xlu0 %1373
      %1375 = vrot.lane.b32.xlu0 %v1334, 16
      %v1376 = vpop.permute.xlu0 %1375
      %1377 = vrot.lane.b32.xlu0 %v1335, 16
      %v1378 = vpop.permute.xlu0 %1377
      %1379 = vrot.lane.b32.xlu0 %v1336, 16
      %v1380 = vpop.permute.xlu0 %1379
      %1381 = vrot.lane.b32.xlu0 %v1337, 16
      %v1382 = vpop.permute.xlu0 %1381
      %1383 = vrot.lane.b32.xlu0 %v1338, 16
      %v1384 = vpop.permute.xlu0 %1383
      %1385 = vrot.lane.b32.xlu0 %v1339, 16
      %v1386 = vpop.permute.xlu0 %1385
      %1387 = vrot.lane.b32.xlu0 %v1340, 16
      %v1388 = vpop.permute.xlu0 %1387
      %v1405 = vadd.f32 %v1309, %v1358
      %v1406 = vadd.f32 %v1310, %v1360
      %v1407 = vadd.f32 %v1311, %v1362
      %v1408 = vadd.f32 %v1312, %v1364
      %v1409 = vadd.f32 %v1313, %v1366
      %v1410 = vadd.f32 %v1314, %v1368
      %v1411 = vadd.f32 %v1315, %v1370
      %v1412 = vadd.f32 %v1316, %v1372
      %v1413 = vadd.f32 %v1317, %v1374
      %v1414 = vadd.f32 %v1318, %v1376
      %v1415 = vadd.f32 %v1319, %v1378
      %v1416 = vadd.f32 %v1320, %v1380
      %v1417 = vadd.f32 %v1321, %v1382
      %v1418 = vadd.f32 %v1322, %v1384
      %v1419 = vadd.f32 %v1323, %v1386
      %v1420 = vadd.f32 %v1324, %v1388
      %v1421 = vmul.f32 %v1405, 0.5
      %v1422 = vmul.f32 %v1406, 0.5
      %v1423 = vmul.f32 %v1407, 0.5
      %v1424 = vmul.f32 %v1408, 0.5
      %v1425 = vmul.f32 %v1409, 0.5
      %v1426 = vmul.f32 %v1410, 0.5
      %v1427 = vmul.f32 %v1411, 0.5
      %v1428 = vmul.f32 %v1412, 0.5
      %v1429 = vmul.f32 %v1413, 0.5
      %v1430 = vmul.f32 %v1414, 0.5
      %v1431 = vmul.f32 %v1415, 0.5
      %v1432 = vmul.f32 %v1416, 0.5
      %v1433 = vmul.f32 %v1417, 0.5
      %v1434 = vmul.f32 %v1418, 0.5
      %v1435 = vmul.f32 %v1419, 0.5
      %v1436 = vmul.f32 %v1420, 0.5
      %v1437 = vmul.f32 %v751, -2.0
      %v1438 = vmul.f32 %v754, -2.0
      %v1439 = vmul.f32 %v759, -2.0
      %v1440 = vmul.f32 %v762, -2.0
      %v1441 = vmul.f32 %v767, -2.0
      %v1442 = vmul.f32 %v770, -2.0
      %v1443 = vmul.f32 %v775, -2.0
      %v1444 = vmul.f32 %v778, -2.0
      %v1445 = vmul.f32 %v783, -2.0
      %v1446 = vmul.f32 %v786, -2.0
      %v1447 = vmul.f32 %v791, -2.0
      %v1448 = vmul.f32 %v794, -2.0
      %v1449 = vmul.f32 %v799, -2.0
      %v1450 = vmul.f32 %v802, -2.0
      %v1451 = vmul.f32 %v807, -2.0
      %v1452 = vmul.f32 %v810, -2.0
      %v1453 = vmul.f32 %v1437, 1.442695
      %v1454 = vpow.pop %v1453
      %v1455 = vmul.f32 %v1438, 1.442695
      %v1456 = vpow.pop %v1455
      %v1457 = vmul.f32 %v1439, 1.442695
      %v1458 = vpow.pop %v1457
      %v1459 = vmul.f32 %v1440, 1.442695
      %v1460 = vpow.pop %v1459
      %v1461 = vmul.f32 %v1441, 1.442695
      %v1462 = vpow.pop %v1461
      %v1463 = vmul.f32 %v1442, 1.442695
      %v1464 = vpow.pop %v1463
      %v1465 = vmul.f32 %v1443, 1.442695
      %v1466 = vpow.pop %v1465
      %v1467 = vmul.f32 %v1444, 1.442695
      %v1468 = vpow.pop %v1467
      %v1469 = vmul.f32 %v1445, 1.442695
      %v1470 = vpow.pop %v1469
      %v1471 = vmul.f32 %v1446, 1.442695
      %v1472 = vpow.pop %v1471
      %v1473 = vmul.f32 %v1447, 1.442695
      %v1474 = vpow.pop %v1473
      %v1475 = vmul.f32 %v1448, 1.442695
      %v1476 = vpow.pop %v1475
      %v1477 = vmul.f32 %v1449, 1.442695
      %v1478 = vpow.pop %v1477
      %v1479 = vmul.f32 %v1450, 1.442695
      %v1480 = vpow.pop %v1479
      %v1481 = vmul.f32 %v1451, 1.442695
      %v1482 = vpow.pop %v1481
      %v1483 = vmul.f32 %v1452, 1.442695
      %v1484 = vpow.pop %v1483
      %1501 = vrot.lane.b32.xlu0 %v1454, 96
      %v1502 = vpop.permute.xlu0 %1501
      %1503 = vrot.lane.b32.xlu0 %v1456, 96
      %v1504 = vpop.permute.xlu0 %1503
      %1505 = vrot.lane.b32.xlu0 %v1458, 96
      %v1506 = vpop.permute.xlu0 %1505
      %1507 = vrot.lane.b32.xlu0 %v1460, 96
      %v1508 = vpop.permute.xlu0 %1507
      %1509 = vrot.lane.b32.xlu0 %v1462, 96
      %v1510 = vpop.permute.xlu0 %1509
      %1511 = vrot.lane.b32.xlu0 %v1464, 96
      %v1512 = vpop.permute.xlu0 %1511
      %1513 = vrot.lane.b32.xlu0 %v1466, 96
      %v1514 = vpop.permute.xlu0 %1513
      %1515 = vrot.lane.b32.xlu0 %v1468, 96
      %v1516 = vpop.permute.xlu0 %1515
      %1517 = vrot.lane.b32.xlu0 %v1470, 96
      %v1518 = vpop.permute.xlu0 %1517
      %1519 = vrot.lane.b32.xlu0 %v1472, 96
      %v1520 = vpop.permute.xlu0 %1519
      %1521 = vrot.lane.b32.xlu0 %v1474, 96
      %v1522 = vpop.permute.xlu0 %1521
      %1523 = vrot.lane.b32.xlu0 %v1476, 96
      %v1524 = vpop.permute.xlu0 %1523
      %1525 = vrot.lane.b32.xlu0 %v1478, 96
      %v1526 = vpop.permute.xlu0 %1525
      %1527 = vrot.lane.b32.xlu0 %v1480, 96
      %v1528 = vpop.permute.xlu0 %1527
      %1529 = vrot.lane.b32.xlu0 %v1482, 96
      %v1530 = vpop.permute.xlu0 %1529
      %1531 = vrot.lane.b32.xlu0 %v1484, 96
      %v1532 = vpop.permute.xlu0 %1531
      %v1549 = vmul.f32 %v1421, %v1502
      %v1550 = vmul.f32 %v1422, %v1504
      %v1551 = vmul.f32 %v1423, %v1506
      %v1552 = vmul.f32 %v1424, %v1508
      %v1553 = vmul.f32 %v1425, %v1510
      %v1554 = vmul.f32 %v1426, %v1512
      %v1555 = vmul.f32 %v1427, %v1514
      %v1556 = vmul.f32 %v1428, %v1516
      %v1557 = vmul.f32 %v1429, %v1518
      %v1558 = vmul.f32 %v1430, %v1520
      %v1559 = vmul.f32 %v1431, %v1522
      %v1560 = vmul.f32 %v1432, %v1524
      %v1561 = vmul.f32 %v1433, %v1526
      %v1562 = vmul.f32 %v1434, %v1528
      %v1563 = vmul.f32 %v1435, %v1530
      %v1564 = vmul.f32 %v1436, %v1532
      %1581 = vrot.lane.b32.xlu0 %v1549, 32
      %v1582 = vpop.permute.xlu0 %1581
      %1583 = vrot.lane.b32.xlu0 %v1550, 32
      %v1584 = vpop.permute.xlu0 %1583
      %1585 = vrot.lane.b32.xlu0 %v1551, 32
      %v1586 = vpop.permute.xlu0 %1585
      %1587 = vrot.lane.b32.xlu0 %v1552, 32
      %v1588 = vpop.permute.xlu0 %1587
      %1589 = vrot.lane.b32.xlu0 %v1553, 32
      %v1590 = vpop.permute.xlu0 %1589
      %1591 = vrot.lane.b32.xlu0 %v1554, 32
      %v1592 = vpop.permute.xlu0 %1591
      %1593 = vrot.lane.b32.xlu0 %v1555, 32
      %v1594 = vpop.permute.xlu0 %1593
      %1595 = vrot.lane.b32.xlu0 %v1556, 32
      %v1596 = vpop.permute.xlu0 %1595
      %1597 = vrot.lane.b32.xlu0 %v1557, 32
      %v1598 = vpop.permute.xlu0 %1597
      %1599 = vrot.lane.b32.xlu0 %v1558, 32
      %v1600 = vpop.permute.xlu0 %1599
      %1601 = vrot.lane.b32.xlu0 %v1559, 32
      %v1602 = vpop.permute.xlu0 %1601
      %1603 = vrot.lane.b32.xlu0 %v1560, 32
      %v1604 = vpop.permute.xlu0 %1603
      %1605 = vrot.lane.b32.xlu0 %v1561, 32
      %v1606 = vpop.permute.xlu0 %1605
      %1607 = vrot.lane.b32.xlu0 %v1562, 32
      %v1608 = vpop.permute.xlu0 %1607
      %1609 = vrot.lane.b32.xlu0 %v1563, 32
      %v1610 = vpop.permute.xlu0 %1609
      %1611 = vrot.lane.b32.xlu0 %v1564, 32
      %v1612 = vpop.permute.xlu0 %1611
      %v1629 = vadd.f32 %v1293, %v1582
      %v1630 = vadd.f32 %v1294, %v1584
      %v1631 = vadd.f32 %v1295, %v1586
      %v1632 = vadd.f32 %v1296, %v1588
      %v1633 = vadd.f32 %v1297, %v1590
      %v1634 = vadd.f32 %v1298, %v1592
      %v1635 = vadd.f32 %v1299, %v1594
      %v1636 = vadd.f32 %v1300, %v1596
      %v1637 = vadd.f32 %v1301, %v1598
      %v1638 = vadd.f32 %v1302, %v1600
      %v1639 = vadd.f32 %v1303, %v1602
      %v1640 = vadd.f32 %v1304, %v1604
      %v1641 = vadd.f32 %v1305, %v1606
      %v1642 = vadd.f32 %v1306, %v1608
      %v1643 = vadd.f32 %v1307, %v1610
      %v1644 = vadd.f32 %v1308, %v1612
      %v1645 = vsub.f32 %v1629, 0.5
      %v1646 = vsub.f32 %v1630, 0.5
      %v1647 = vsub.f32 %v1631, 0.5
      %v1648 = vsub.f32 %v1632, 0.5
      %v1649 = vsub.f32 %v1633, 0.5
      %v1650 = vsub.f32 %v1634, 0.5
      %v1651 = vsub.f32 %v1635, 0.5
      %v1652 = vsub.f32 %v1636, 0.5
      %v1653 = vsub.f32 %v1637, 0.5
      %v1654 = vsub.f32 %v1638, 0.5
      %v1655 = vsub.f32 %v1639, 0.5
      %v1656 = vsub.f32 %v1640, 0.5
      %v1657 = vsub.f32 %v1641, 0.5
      %v1658 = vsub.f32 %v1642, 0.5
      %v1659 = vsub.f32 %v1643, 0.5
      %v1660 = vsub.f32 %v1644, 0.5
      %1677 = vrot.lane.b32.xlu0 %v1645, 80
      %v1678 = vpop.permute.xlu0 %1677
      %1679 = vrot.lane.b32.xlu0 %v1646, 80
      %v1680 = vpop.permute.xlu0 %1679
      %1681 = vrot.lane.b32.xlu0 %v1647, 80
      %v1682 = vpop.permute.xlu0 %1681
      %1683 = vrot.lane.b32.xlu0 %v1648, 80
      %v1684 = vpop.permute.xlu0 %1683
      %1685 = vrot.lane.b32.xlu0 %v1649, 80
      %v1686 = vpop.permute.xlu0 %1685
      %1687 = vrot.lane.b32.xlu0 %v1650, 80
      %v1688 = vpop.permute.xlu0 %1687
      %1689 = vrot.lane.b32.xlu0 %v1651, 80
      %v1690 = vpop.permute.xlu0 %1689
      %1691 = vrot.lane.b32.xlu0 %v1652, 80
      %v1692 = vpop.permute.xlu0 %1691
      %1693 = vrot.lane.b32.xlu0 %v1653, 80
      %v1694 = vpop.permute.xlu0 %1693
      %1695 = vrot.lane.b32.xlu0 %v1654, 80
      %v1696 = vpop.permute.xlu0 %1695
      %1697 = vrot.lane.b32.xlu0 %v1655, 80
      %v1698 = vpop.permute.xlu0 %1697
      %1699 = vrot.lane.b32.xlu0 %v1656, 80
      %v1700 = vpop.permute.xlu0 %1699
      %1701 = vrot.lane.b32.xlu0 %v1657, 80
      %v1702 = vpop.permute.xlu0 %1701
      %1703 = vrot.lane.b32.xlu0 %v1658, 80
      %v1704 = vpop.permute.xlu0 %1703
      %1705 = vrot.lane.b32.xlu0 %v1659, 80
      %v1706 = vpop.permute.xlu0 %1705
      %1707 = vrot.lane.b32.xlu0 %v1660, 80
      %v1708 = vpop.permute.xlu0 %1707
      %vm1725 = vcmask 130048
      %v1726 = vsel %vm1725, %v1678, 0.0
      %1727 = vadd.xlane.f32.xlu0 %v1726
      %v1728 = vpop.xlane.xlu0 %1727
      %v1729 = vsel %vm1725, %v1680, 0.0
      %1730 = vadd.xlane.f32.xlu0 %v1729
      %v1731 = vpop.xlane.xlu0 %1730
      %v1732 = vsel %vm1725, %v1682, 0.0
      %1733 = vadd.xlane.f32.xlu0 %v1732
      %v1734 = vpop.xlane.xlu0 %1733
      %v1735 = vsel %vm1725, %v1684, 0.0
      %1736 = vadd.xlane.f32.xlu0 %v1735
      %v1737 = vpop.xlane.xlu0 %1736
      %v1738 = vsel %vm1725, %v1686, 0.0
      %1739 = vadd.xlane.f32.xlu0 %v1738
      %v1740 = vpop.xlane.xlu0 %1739
      %v1741 = vsel %vm1725, %v1688, 0.0
      %1742 = vadd.xlane.f32.xlu0 %v1741
      %v1743 = vpop.xlane.xlu0 %1742
      %v1744 = vsel %vm1725, %v1690, 0.0
      %1745 = vadd.xlane.f32.xlu0 %v1744
      %v1746 = vpop.xlane.xlu0 %1745
      %v1747 = vsel %vm1725, %v1692, 0.0
      %1748 = vadd.xlane.f32.xlu0 %v1747
      %v1749 = vpop.xlane.xlu0 %1748
      %v1750 = vsel %vm1725, %v1694, 0.0
      %1751 = vadd.xlane.f32.xlu0 %v1750
      %v1752 = vpop.xlane.xlu0 %1751
      %v1753 = vsel %vm1725, %v1696, 0.0
      %1754 = vadd.xlane.f32.xlu0 %v1753
      %v1755 = vpop.xlane.xlu0 %1754
      %v1756 = vsel %vm1725, %v1698, 0.0
      %1757 = vadd.xlane.f32.xlu0 %v1756
      %v1758 = vpop.xlane.xlu0 %1757
      %v1759 = vsel %vm1725, %v1700, 0.0
      %1760 = vadd.xlane.f32.xlu0 %v1759
      %v1761 = vpop.xlane.xlu0 %1760
      %v1762 = vsel %vm1725, %v1702, 0.0
      %1763 = vadd.xlane.f32.xlu0 %v1762
      %v1764 = vpop.xlane.xlu0 %1763
      %v1765 = vsel %vm1725, %v1704, 0.0
      %1766 = vadd.xlane.f32.xlu0 %v1765
      %v1767 = vpop.xlane.xlu0 %1766
      %v1768 = vsel %vm1725, %v1706, 0.0
      %1769 = vadd.xlane.f32.xlu0 %v1768
      %v1770 = vpop.xlane.xlu0 %1769
      %v1771 = vsel %vm1725, %v1708, 0.0
      %1772 = vadd.xlane.f32.xlu0 %v1771
      %v1773 = vpop.xlane.xlu0 %1772
      %v1774 = vmax.f32 %v1728, -100.0
      %v1775 = vmax.f32 %v1731, -100.0
      %v1776 = vmax.f32 %v1734, -100.0
      %v1777 = vmax.f32 %v1737, -100.0
      %v1778 = vmax.f32 %v1740, -100.0
      %v1779 = vmax.f32 %v1743, -100.0
      %v1780 = vmax.f32 %v1746, -100.0
      %v1781 = vmax.f32 %v1749, -100.0
      %v1782 = vmax.f32 %v1752, -100.0
      %v1783 = vmax.f32 %v1755, -100.0
      %v1784 = vmax.f32 %v1758, -100.0
      %v1785 = vmax.f32 %v1761, -100.0
      %v1786 = vmax.f32 %v1764, -100.0
      %v1787 = vmax.f32 %v1767, -100.0
      %v1788 = vmax.f32 %v1770, -100.0
      %v1789 = vmax.f32 %v1773, -100.0
      %v1790 = vmin.f32 %v1774, 100.0
      %v1791 = vmin.f32 %v1775, 100.0
      %v1792 = vmin.f32 %v1776, 100.0
      %v1793 = vmin.f32 %v1777, 100.0
      %v1794 = vmin.f32 %v1778, 100.0
      %v1795 = vmin.f32 %v1779, 100.0
      %v1796 = vmin.f32 %v1780, 100.0
      %v1797 = vmin.f32 %v1781, 100.0
      %v1798 = vmin.f32 %v1782, 100.0
      %v1799 = vmin.f32 %v1783, 100.0
      %v1800 = vmin.f32 %v1784, 100.0
      %v1801 = vmin.f32 %v1785, 100.0
      %v1802 = vmin.f32 %v1786, 100.0
      %v1803 = vmin.f32 %v1787, 100.0
      %v1804 = vmin.f32 %v1788, 100.0
      %v1805 = vmin.f32 %v1789, 100.0
      %1806 = vst.msk [vmem:[%s221] sm:$0xff] %vm1725, %v1005
      %1807 = vst.msk [vmem:[%s221 + $0x8] sm:$0xff] %vm1725, %v1006
      %1808 = vst.msk [vmem:[%s221 + $0x10] sm:$0xff] %vm1725, %v1007
      %1809 = vst.msk [vmem:[%s221 + $0x18] sm:$0xff] %vm1725, %v1008
      %1810 = vst.msk [vmem:[%s221 + $0x20] sm:$0xff] %vm1725, %v1009
      %1811 = vst.msk [vmem:[%s221 + $0x28] sm:$0xff] %vm1725, %v1010
      %1812 = vst.msk [vmem:[%s221 + $0x30] sm:$0xff] %vm1725, %v1011
      %1813 = vst.msk [vmem:[%s221 + $0x38] sm:$0xff] %vm1725, %v1012
      %1814 = vst.msk [vmem:[%s221 + $0x40] sm:$0xff] %vm1725, %v1013
      %1815 = vst.msk [vmem:[%s221 + $0x48] sm:$0xff] %vm1725, %v1014
      %1816 = vst.msk [vmem:[%s221 + $0x50] sm:$0xff] %vm1725, %v1015
      %1817 = vst.msk [vmem:[%s221 + $0x58] sm:$0xff] %vm1725, %v1016
      %1818 = vst.msk [vmem:[%s221 + $0x60] sm:$0xff] %vm1725, %v1017
      %1819 = vst.msk [vmem:[%s221 + $0x68] sm:$0xff] %vm1725, %v1018
      %1820 = vst.msk [vmem:[%s221 + $0x70] sm:$0xff] %vm1725, %v1019
      %1821 = vst.msk [vmem:[%s221 + $0x78] sm:$0xff] %vm1725, %v1020
      %1838 = vrot.lane.b32.xlu0 %v1149, 16
      %v1839 = vpop.permute.xlu0 %1838
      %1840 = vrot.lane.b32.xlu0 %v1150, 16
      %v1841 = vpop.permute.xlu0 %1840
      %1842 = vrot.lane.b32.xlu0 %v1151, 16
      %v1843 = vpop.permute.xlu0 %1842
      %1844 = vrot.lane.b32.xlu0 %v1152, 16
      %v1845 = vpop.permute.xlu0 %1844
      %1846 = vrot.lane.b32.xlu0 %v1153, 16
      %v1847 = vpop.permute.xlu0 %1846
      %1848 = vrot.lane.b32.xlu0 %v1154, 16
      %v1849 = vpop.permute.xlu0 %1848
      %1850 = vrot.lane.b32.xlu0 %v1155, 16
      %v1851 = vpop.permute.xlu0 %1850
      %1852 = vrot.lane.b32.xlu0 %v1156, 16
      %v1853 = vpop.permute.xlu0 %1852
      %1854 = vrot.lane.b32.xlu0 %v1157, 16
      %v1855 = vpop.permute.xlu0 %1854
      %1856 = vrot.lane.b32.xlu0 %v1158, 16
      %v1857 = vpop.permute.xlu0 %1856
      %1858 = vrot.lane.b32.xlu0 %v1159, 16
      %v1859 = vpop.permute.xlu0 %1858
      %1860 = vrot.lane.b32.xlu0 %v1160, 16
      %v1861 = vpop.permute.xlu0 %1860
      %1862 = vrot.lane.b32.xlu0 %v1161, 16
      %v1863 = vpop.permute.xlu0 %1862
      %1864 = vrot.lane.b32.xlu0 %v1162, 16
      %v1865 = vpop.permute.xlu0 %1864
      %1866 = vrot.lane.b32.xlu0 %v1163, 16
      %v1867 = vpop.permute.xlu0 %1866
      %1868 = vrot.lane.b32.xlu0 %v1164, 16
      %v1869 = vpop.permute.xlu0 %1868
      %vm1886 = vcmask 261248
      %1887 = vst.msk [vmem:[%s221] sm:$0xff] %vm1886, %v1839
      %1888 = vst.msk [vmem:[%s221 + $0x8] sm:$0xff] %vm1886, %v1841
      %1889 = vst.msk [vmem:[%s221 + $0x10] sm:$0xff] %vm1886, %v1843
      %1890 = vst.msk [vmem:[%s221 + $0x18] sm:$0xff] %vm1886, %v1845
      %1891 = vst.msk [vmem:[%s221 + $0x20] sm:$0xff] %vm1886, %v1847
      %1892 = vst.msk [vmem:[%s221 + $0x28] sm:$0xff] %vm1886, %v1849
      %1893 = vst.msk [vmem:[%s221 + $0x30] sm:$0xff] %vm1886, %v1851
      %1894 = vst.msk [vmem:[%s221 + $0x38] sm:$0xff] %vm1886, %v1853
      %1895 = vst.msk [vmem:[%s221 + $0x40] sm:$0xff] %vm1886, %v1855
      %1896 = vst.msk [vmem:[%s221 + $0x48] sm:$0xff] %vm1886, %v1857
      %1897 = vst.msk [vmem:[%s221 + $0x50] sm:$0xff] %vm1886, %v1859
      %1898 = vst.msk [vmem:[%s221 + $0x58] sm:$0xff] %vm1886, %v1861
      %1899 = vst.msk [vmem:[%s221 + $0x60] sm:$0xff] %vm1886, %v1863
      %1900 = vst.msk [vmem:[%s221 + $0x68] sm:$0xff] %vm1886, %v1865
      %1901 = vst.msk [vmem:[%s221 + $0x70] sm:$0xff] %vm1886, %v1867
      %1902 = vst.msk [vmem:[%s221 + $0x78] sm:$0xff] %vm1886, %v1869
      %vm1903 = vcmask 269568
      %1904 = vst.msk [vmem:[%s221] sm:$0xff] %vm1903, %v1790
      %1905 = vst.msk [vmem:[%s221 + $0x8] sm:$0xff] %vm1903, %v1791
      %1906 = vst.msk [vmem:[%s221 + $0x10] sm:$0xff] %vm1903, %v1792
      %1907 = vst.msk [vmem:[%s221 + $0x18] sm:$0xff] %vm1903, %v1793
      %1908 = vst.msk [vmem:[%s221 + $0x20] sm:$0xff] %vm1903, %v1794
      %1909 = vst.msk [vmem:[%s221 + $0x28] sm:$0xff] %vm1903, %v1795
      %1910 = vst.msk [vmem:[%s221 + $0x30] sm:$0xff] %vm1903, %v1796
      %1911 = vst.msk [vmem:[%s221 + $0x38] sm:$0xff] %vm1903, %v1797
      %1912 = vst.msk [vmem:[%s221 + $0x40] sm:$0xff] %vm1903, %v1798
      %1913 = vst.msk [vmem:[%s221 + $0x48] sm:$0xff] %vm1903, %v1799
      %1914 = vst.msk [vmem:[%s221 + $0x50] sm:$0xff] %vm1903, %v1800
      %1915 = vst.msk [vmem:[%s221 + $0x58] sm:$0xff] %vm1903, %v1801
      %1916 = vst.msk [vmem:[%s221 + $0x60] sm:$0xff] %vm1903, %v1802
      %1917 = vst.msk [vmem:[%s221 + $0x68] sm:$0xff] %vm1903, %v1803
      %1918 = vst.msk [vmem:[%s221 + $0x70] sm:$0xff] %vm1903, %v1804
      %1919 = vst.msk [vmem:[%s221 + $0x78] sm:$0xff] %vm1903, %v1805
      %vm1920 = vcmask 1047816
      %1921 = vst.msk [vmem:[%s221] sm:$0xff] %vm1920, 0.0
      %1922 = vst.msk [vmem:[%s221 + $0x8] sm:$0xff] %vm1920, 0.0
      %1923 = vst.msk [vmem:[%s221 + $0x10] sm:$0xff] %vm1920, 0.0
      %1924 = vst.msk [vmem:[%s221 + $0x18] sm:$0xff] %vm1920, 0.0
      %1925 = vst.msk [vmem:[%s221 + $0x20] sm:$0xff] %vm1920, 0.0
      %1926 = vst.msk [vmem:[%s221 + $0x28] sm:$0xff] %vm1920, 0.0
      %1927 = vst.msk [vmem:[%s221 + $0x30] sm:$0xff] %vm1920, 0.0
      %1928 = vst.msk [vmem:[%s221 + $0x38] sm:$0xff] %vm1920, 0.0
      %1929 = vst.msk [vmem:[%s221 + $0x40] sm:$0xff] %vm1920, 0.0
      %1930 = vst.msk [vmem:[%s221 + $0x48] sm:$0xff] %vm1920, 0.0
      %1931 = vst.msk [vmem:[%s221 + $0x50] sm:$0xff] %vm1920, 0.0
      %1932 = vst.msk [vmem:[%s221 + $0x58] sm:$0xff] %vm1920, 0.0
      %1933 = vst.msk [vmem:[%s221 + $0x60] sm:$0xff] %vm1920, 0.0
      %1934 = vst.msk [vmem:[%s221 + $0x68] sm:$0xff] %vm1920, 0.0
      %1935 = vst.msk [vmem:[%s221 + $0x70] sm:$0xff] %vm1920, 0.0
      %1936 = vst.msk [vmem:[%s221 + $0x78] sm:$0xff] %vm1920, 0.0
      %s1937 = smul.u32 16, %s15
      %p1938 = scmp.lt.s32.totalorder %s1937, 31
      %s1939 = scalar_select %p1938, %s1937, 31
      %s1940 = smul.addr %s1939, 8
      %s1941 = scalar_lea.vmem %s4, %s1940
      // Predicated region
      $region37: #{skill_prior_policy_forward.1} parent=35 // pred_check
        %p1942 = pneg %p127
      $region38: #{skill_prior_policy_forward.1} parent=35 // pred_check_branch
        %1944 = sbr.rel (%p1942) target = $region40
      $region39: #{skill_prior_policy_forward.1} parent=35 // pred_region
        %s1945 = smul.u32 16, %s15
      $region40: #{skill_prior_policy_forward.1} parent=35 // pred_fallthru
        _
    $region36: #{skill_prior_policy_forward.1} parent=5 // pred_fallthru
      _
    %p1946 = scmp.le.s32.totalorder 2, %s10
    // Predicated region
    $region41: #{skill_prior_policy_forward.1} parent=5 // pred_check
      %p1947 = pneg %p1946
    $region42: #{skill_prior_policy_forward.1} parent=5 // pred_check_branch
      %1949 = sbr.rel (%p1947) target = $region44
    $region43: #{skill_prior_policy_forward.1} parent=5 // pred_region
      %s1950 = ssub.s32 %s10, 2
      // Predicated region
      $region45: #{skill_prior_policy_forward.1} parent=43 // pred_check
        %p1951 = pneg %p133
      $region46: #{skill_prior_policy_forward.1} parent=43 // pred_check_branch
        %1953 = sbr.rel (%p1951) target = $region48
      $region47: #{skill_prior_policy_forward.1} parent=43 // pred_region
        %s1954 = smul.u32 16, %s16
        %p1955 = scmp.lt.s32.totalorder %s1954, 31
        %s1956 = scalar_select %p1955, %s1954, 31
        %s1957 = smul.addr %s1956, 8
        %s1958 = scalar_lea.vmem %s4, %s1957
      $region48: #{skill_prior_policy_forward.1} parent=43 // pred_fallthru
        _
    $region44: #{skill_prior_policy_forward.1} parent=5 // pred_fallthru
      _
  $region6: #{skill_prior_policy_forward.1} parent=0 // loop_footer
    %s14 = sadd.s32 1, %s10
  $region7: #{skill_prior_policy_forward.1} parent=0 // loop_footer_branch
    %9 = sbr.rel target = $region3
  $region8: #{skill_prior_policy_forward.1} parent=0 // loop_exit
    _

</llo_original>
